<compile_context>
chip_gen: v7x
topology: tpu7x:2x2x1
jax: 0.10.0
libtpu: 0.0.40
codegen_flags: <defaults>
</compile_context>

<pallas_src>
import jax
import jax.numpy as jnp
from jax import lax
from jax.experimental import pallas as pl
from jax.experimental.pallas import tpu as pltpu

_LOG2E = 1.4426950408889634

# Contract the last dim of lhs with the last dim of rhs: lhs @ rhs^T, no transpose.
_DN_LAST_LAST = (((1,), (1,)), ((), ()))


# ---------------------------------------------------------------------------
# Generation-aware defaults
# ---------------------------------------------------------------------------
def _generation_defaults():
    try:
        kind = jax.devices()[0].device_kind.lower()
    except Exception:
        kind = "unknown"
    if "v7" in kind:
        # 64 MiB physical VMEM per TensorCore -> leave headroom for the compiler.
        return {"vmem_limit": 48 * 1024 * 1024, "mxu_pref": 256}
    if "v6" in kind:
        # 128 MiB physical; scoped default (32 MiB) badly underuses it.
        return {"vmem_limit": 96 * 1024 * 1024, "mxu_pref": 256}
    if "v5" in kind:
        # v5e: MXU fills at 128; spend VMEM on larger tq instead of 256-alignment.
        return {"vmem_limit": 96 * 1024 * 1024, "mxu_pref": 128}
    return {"vmem_limit": 64 * 1024 * 1024, "mxu_pref": 128}


# ---------------------------------------------------------------------------
# VMEM- and dtype-aware tile selection
# ---------------------------------------------------------------------------
def _tile_candidates(n):
    """Divisors of n that are sublane (8) multiples, plus n itself (ascending)."""
    cands = {n}
    for d in range(8, n + 1, 8):
        if n % d == 0:
            cands.add(d)
    return sorted(cands)


def _attn_footprint(tq, tk, H, db):
    """Approximate per-step VMEM footprint (bytes) of the fused kernel."""
    xq = 2 * tq * H * db                   # double-buffered x (query role)
    xkv = 2 * tk * H * db                  # double-buffered x (key/value role)
    w = 2 * 2 * H * H * db                 # Wk^T + Wv^T (conservatively 2 buffers)
    out = 2 * tq * H * db                  # double-buffered y tile
    scr = (2 * tq * H + 2 * tq) * 4        # kq, acc, m, l scratch (f32)
    tmp = (tk * H + 3 * tq * tk) * 4       # v_kv + scores/p working set (f32)
    return xq + xkv + w + out + scr + tmp


def _select_tiles(S, H, db, budget, mxu_pref):
    """Pick (tq, tk): tk just fills the MXU, remaining budget goes to tq."""
    cands = _tile_candidates(S)
    tk_pref = next((c for c in cands if c >= mxu_pref), cands[-1])
    tk_order = [tk_pref] + [c for c in cands if c < tk_pref][::-1]
    for tk in tk_order:
        for tq in reversed(cands):         # biggest feasible tq first
            if _attn_footprint(tq, tk, H, db) <= budget:
                return tq, tk
    # TODO(synk): nothing fits (huge H, no clean divisor) -> smallest tiles.
    return cands[0], cands[0]


# ---------------------------------------------------------------------------
# Fused kernel: projections + flash-style attention, base-2 online softmax.
# Grid = (B, nq, nk); kv axis (last) is the reduction axis.
# ---------------------------------------------------------------------------
def _fused_attn_kernel(xq_ref, xkv_ref, wkT_ref, wvT_ref, y_ref,
                       kq_sc, m_sc, l_sc, acc_sc):
    ki = pl.program_id(2)
    H = wkT_ref.shape[0]
    # Fold 1/sqrt(H) and log2(e) into the query-role projection (O(tq*H), once
    # per q-tile) so the (tq,tk) scores are already in the base-2 log domain.
    scale = float(H) ** -0.5 * _LOG2E

    @pl.when(ki == 0)
    def _init():
        kq = jnp.dot(xq_ref[0], wkT_ref[...],
                     preferred_element_type=jnp.float32)       # x_q @ Wk^T
        kq_sc[...] = (kq * scale).astype(kq_sc.dtype)
        m_sc[...] = jnp.full_like(m_sc, -jnp.inf)
        l_sc[...] = jnp.zeros_like(l_sc)
        acc_sc[...] = jnp.zeros_like(acc_sc)

    x_kv = xkv_ref[0]                                          # (tk, H) native dtype
    v_kv = jnp.dot(x_kv, wvT_ref[...],
                   preferred_element_type=jnp.float32)         # x_kv @ Wv^T, f32
    v_kv = v_kv.astype(x_kv.dtype)                             # MXU-friendly operand

    # scores (base-2 log domain): kq already carries (1/sqrt(H)) * log2(e).
    s = lax.dot_general(kq_sc[...], v_kv, _DN_LAST_LAST,
                        preferred_element_type=jnp.float32)    # (tq, tk)

    m_prev = m_sc[...]
    m_new = jnp.maximum(m_prev, jnp.max(s, axis=-1, keepdims=True))
    alpha = jnp.exp2(m_prev - m_new)
    p = jnp.exp2(s - m_new)                                    # (tq, tk) f32

    l_sc[...] = alpha * l_sc[...] + jnp.sum(p, axis=-1, keepdims=True)
    acc_sc[...] = alpha * acc_sc[...] + jnp.dot(
        p.astype(x_kv.dtype), x_kv, preferred_element_type=jnp.float32)
    m_sc[...] = m_new

    @pl.when(ki == pl.num_programs(2) - 1)
    def _finalize():
        # Exact reciprocal: runs once per q-tile on a (tq, 1) vector -> free.
        inv_l = 1.0 / l_sc[...]
        y_ref[0] = (acc_sc[...] * inv_l).astype(y_ref.dtype)


# ---------------------------------------------------------------------------
# Wrapper
# ---------------------------------------------------------------------------
def attention_pallas(x, wk, wv, *, vmem_limit_bytes=None):
    """x: (B, S, H); wk/wv: (H, H) PyTorch nn.Linear weights (out, in) layout."""
    B, S, H = x.shape
    gen = _generation_defaults()
    if vmem_limit_bytes is None:
        vmem_limit_bytes = gen["vmem_limit"]

    db = jnp.dtype(x.dtype).itemsize
    budget = int(0.85 * vmem_limit_bytes)                      # headroom
    tq, tk = _select_tiles(S, H, db, budget, gen["mxu_pref"])
    nq, nk = S // tq, S // tk

    # Pre-transpose the PyTorch (out, in) weights once (tiny one-time XLA op) so
    # in-kernel projections are canonical (rows, H) @ (H, H) matmuls.
    wkT = jnp.asarray(wk, dtype=x.dtype).T
    wvT = jnp.asarray(wv, dtype=x.dtype).T

    def build(single_buffer_weights):
        w_kwargs = {"pipeline_mode": pl.Buffered(1)} if single_buffer_weights else {}
        grid_spec = pltpu.PrefetchScalarGridSpec(
            num_scalar_prefetch=0,
            grid=(B, nq, nk),
            in_specs=[
                pl.BlockSpec((1, tq, H), lambda b, qi, ki: (b, qi, 0)),  # x (query role)
                pl.BlockSpec((1, tk, H), lambda b, qi, ki: (b, ki, 0)),  # x (kv role)
                pl.BlockSpec((H, H), lambda b, qi, ki: (0, 0), **w_kwargs),  # Wk^T
                pl.BlockSpec((H, H), lambda b, qi, ki: (0, 0), **w_kwargs),  # Wv^T
            ],
            out_specs=pl.BlockSpec((1, tq, H), lambda b, qi, ki: (b, qi, 0)),
            scratch_shapes=[
                pltpu.VMEM((tq, H), x.dtype),       # kq: scaled query-role projection
                pltpu.VMEM((tq, 1), jnp.float32),   # running max (base-2 domain)
                pltpu.VMEM((tq, 1), jnp.float32),   # running denominator
                pltpu.VMEM((tq, H), jnp.float32),   # output accumulator
            ],
        )
        return pl.pallas_call(
            _fused_attn_kernel,
            out_shape=jax.ShapeDtypeStruct((B, S, H), x.dtype),
            grid_spec=grid_spec,
            compiler_params=pltpu.CompilerParams(
                dimension_semantics=("parallel", "parallel", "arbitrary"),
                vmem_limit_bytes=vmem_limit_bytes,
            ),
        )

    try:
        # Weights never change across the grid -> single-buffer them to free VMEM.
        return build(True)(x, x, wkT, wvT)
    except Exception:
        # pipeline_mode/Buffered(1) unsupported on this jax version -> default specs.
        return build(False)(x, x, wkT, wvT)


# ---------------------------------------------------------------------------
# Reference + test harness
# ---------------------------------------------------------------------------
def _orthogonal(key, n):
    """Deterministic orthogonal init (mirrors nn.init.orthogonal_ semantics)."""
    a = jax.random.normal(key, (n, n), dtype=jnp.float32)
    q, r = jnp.linalg.qr(a)
    d = jnp.sign(jnp.diagonal(r))
    return q * d[None, :]


def _reference(x, wk, wv):
    k = jnp.einsum("bsh,oh->bso", x, wk)
    v = jnp.einsum("bsh,oh->bso", x, wv)
    h = x.shape[-1]
    scores = jnp.einsum("bqh,bkh->bqk", k, v) / (h ** 0.5)
    w = jax.nn.softmax(scores, axis=-1)
    return jnp.einsum("bqk,bkh->bqh", w, x)


if __name__ == "__main__":
    B, S, H = 2, 8, 32
    key = jax.random.PRNGKey(0)
    kx, kwk, kwv = jax.random.split(key, 3)

    x = jax.random.normal(kx, (B, S, H), dtype=jnp.float32)
    wk = _orthogonal(kwk, H)   # w_k.weight, shape (H, H) = (out, in)
    wv = _orthogonal(kwv, H)   # w_v.weight, shape (H, H) = (out, in)

    y = attention_pallas(x, wk, wv)
    y = jax.block_until_ready(y)

    y_ref = _reference(x, wk, wv)
    assert y.shape == (B, S, H)
    assert y.dtype == x.dtype
    assert jnp.allclose(y, y_ref, atol=1e-2, rtol=1e-2), "mismatch vs JAX reference"

    print("KERNEL_OK")
</pallas_src>

<mosaic_0001>
module attributes {stable_mosaic.version = 11 : i64} {
  func.func @_fused_attn_kernel(%arg0: i32, %arg1: i32, %arg2: i32, %arg3: memref<1x8x32xf32, #tpu.memory_space<vmem>>, %arg4: memref<1x8x32xf32, #tpu.memory_space<vmem>>, %arg5: memref<32x32xf32, #tpu.memory_space<vmem>>, %arg6: memref<32x32xf32, #tpu.memory_space<vmem>>, %arg7: memref<1x8x32xf32, #tpu.memory_space<vmem>>, %arg8: memref<8x32xf32, #tpu.memory_space<vmem>>, %arg9: memref<8x1xf32, #tpu.memory_space<vmem>>, %arg10: memref<8x1xf32, #tpu.memory_space<vmem>>, %arg11: memref<8x32xf32, #tpu.memory_space<vmem>>) attributes {dimension_semantics = [#tpu.dimension_semantics<parallel>, #tpu.dimension_semantics<parallel>, #tpu.dimension_semantics<arbitrary>], iteration_bounds = array<i64: 2, 1, 1>, scalar_prefetch = 0 : i64, scratch_operands = 4 : i64, tpu.core_type = #tpu.core_type<tc>, window_params = [{transform_indices = @transform_0, window_bounds = array<i64: 1, 8, 32>}, {transform_indices = @transform_1, window_bounds = array<i64: 1, 8, 32>}, {pipeline_mode = #tpu.pipeline_mode<synchronous>, transform_indices = @transform_2, window_bounds = array<i64: 32, 32>}, {pipeline_mode = #tpu.pipeline_mode<synchronous>, transform_indices = @transform_3, window_bounds = array<i64: 32, 32>}, {transform_indices = @transform_4, window_bounds = array<i64: 1, 8, 32>}]} {
    %c0_i32 = arith.constant 0 : i32
    %0 = arith.cmpi eq, %arg2, %c0_i32 : i32
    %1 = arith.extui %0 : i1 to i32
    %c0_i32_0 = arith.constant 0 : i32
    %2 = arith.cmpi ne, %1, %c0_i32_0 : i32
    scf.if %2 {
      %c0_25 = arith.constant 0 : index
      %c0_26 = arith.constant 0 : index
      %c0_27 = arith.constant 0 : index
      %34 = vector.load %arg3[%c0_25, %c0_26, %c0_27] : memref<1x8x32xf32, #tpu.memory_space<vmem>>, vector<1x8x32xf32>
      %35 = vector.shape_cast %34 : vector<1x8x32xf32> to vector<8x32xf32>
      %c0_28 = arith.constant 0 : index
      %c0_29 = arith.constant 0 : index
      %36 = vector.load %arg5[%c0_28, %c0_29] : memref<32x32xf32, #tpu.memory_space<vmem>>, vector<32x32xf32>
      %cst_30 = arith.constant dense<0.000000e+00> : vector<8x32xf32>
      %37 = tpu.matmul %35, %36, %cst_30 {dimension_numbers = #tpu.dot_dimension_numbers<[1], [0], [0], [1], [0, 0, 1, 1], [], []>} : vector<8x32xf32>, vector<32x32xf32>, vector<8x32xf32> -> vector<8x32xf32>
      %cst_31 = arith.constant 0.255034864 : f32
      %38 = vector.broadcast %cst_31 : f32 to vector<8x32xf32>
      %39 = arith.mulf %37, %38 : vector<8x32xf32>
      %c0_32 = arith.constant 0 : index
      %c0_33 = arith.constant 0 : index
      %40 = vector.load %arg8[%c0_32, %c0_33] : memref<8x32xf32, #tpu.memory_space<vmem>>, vector<8x32xf32>
      tpu.vector_store %arg8[%c0_32, %c0_33], %39 {strides = array<i32>} : memref<8x32xf32, #tpu.memory_space<vmem>>, vector<8x32xf32>,
      %cst_34 = arith.constant 0xFF800000 : f32
      %41 = vector.broadcast %cst_34 : f32 to vector<8x1xf32>
      %c0_35 = arith.constant 0 : index
      %c0_36 = arith.constant 0 : index
      %42 = vector.load %arg9[%c0_35, %c0_36] : memref<8x1xf32, #tpu.memory_space<vmem>>, vector<8x1xf32>
      tpu.vector_store %arg9[%c0_35, %c0_36], %41 {strides = array<i32>} : memref<8x1xf32, #tpu.memory_space<vmem>>, vector<8x1xf32>,
      %cst_37 = arith.constant 0.000000e+00 : f32
      %43 = vector.broadcast %cst_37 : f32 to vector<8x1xf32>
      %c0_38 = arith.constant 0 : index
      %c0_39 = arith.constant 0 : index
      %44 = vector.load %arg10[%c0_38, %c0_39] : memref<8x1xf32, #tpu.memory_space<vmem>>, vector<8x1xf32>
      tpu.vector_store %arg10[%c0_38, %c0_39], %43 {strides = array<i32>} : memref<8x1xf32, #tpu.memory_space<vmem>>, vector<8x1xf32>,
      %cst_40 = arith.constant 0.000000e+00 : f32
      %45 = vector.broadcast %cst_40 : f32 to vector<8x32xf32>
      %c0_41 = arith.constant 0 : index
      %c0_42 = arith.constant 0 : index
      %46 = vector.load %arg11[%c0_41, %c0_42] : memref<8x32xf32, #tpu.memory_space<vmem>>, vector<8x32xf32>
      tpu.vector_store %arg11[%c0_41, %c0_42], %45 {strides = array<i32>} : memref<8x32xf32, #tpu.memory_space<vmem>>, vector<8x32xf32>,
    } else {
    }
    %c0 = arith.constant 0 : index
    %c0_1 = arith.constant 0 : index
    %c0_2 = arith.constant 0 : index
    %3 = vector.load %arg4[%c0, %c0_1, %c0_2] : memref<1x8x32xf32, #tpu.memory_space<vmem>>, vector<1x8x32xf32>
    %4 = vector.shape_cast %3 : vector<1x8x32xf32> to vector<8x32xf32>
    %c0_3 = arith.constant 0 : index
    %c0_4 = arith.constant 0 : index
    %5 = vector.load %arg6[%c0_3, %c0_4] : memref<32x32xf32, #tpu.memory_space<vmem>>, vector<32x32xf32>
    %cst = arith.constant dense<0.000000e+00> : vector<8x32xf32>
    %6 = tpu.matmul %4, %5, %cst {dimension_numbers = #tpu.dot_dimension_numbers<[1], [0], [0], [1], [0, 0, 1, 1], [], []>} : vector<8x32xf32>, vector<32x32xf32>, vector<8x32xf32> -> vector<8x32xf32>
    %c0_5 = arith.constant 0 : index
    %c0_6 = arith.constant 0 : index
    %7 = vector.load %arg8[%c0_5, %c0_6] : memref<8x32xf32, #tpu.memory_space<vmem>>, vector<8x32xf32>
    %cst_7 = arith.constant dense<0.000000e+00> : vector<8x8xf32>
    %8 = tpu.matmul %7, %6, %cst_7 {dimension_numbers = #tpu.dot_dimension_numbers<[1], [1], [0], [0], [0, 0, 1, 0], [], []>} : vector<8x32xf32>, vector<8x32xf32>, vector<8x8xf32> -> vector<8x8xf32>
    %c0_8 = arith.constant 0 : index
    %c0_9 = arith.constant 0 : index
    %9 = vector.load %arg9[%c0_8, %c0_9] : memref<8x1xf32, #tpu.memory_space<vmem>>, vector<8x1xf32>
    %cst_10 = arith.constant dense<0xFF800000> : vector<8xf32>
    %10 = vector.multi_reduction <maximumf>, %8, %cst_10 [1] : vector<8x8xf32> to vector<8xf32>
    %11 = vector.shape_cast %10 : vector<8xf32> to vector<8x1xf32>
    %12 = arith.maximumf %9, %11 : vector<8x1xf32>
    %13 = arith.subf %9, %12 : vector<8x1xf32>
    %14 = math.exp2 %13 : vector<8x1xf32>
    %15 = vector.broadcast %12 : vector<8x1xf32> to vector<8x8xf32>
    %16 = arith.subf %8, %15 : vector<8x8xf32>
    %17 = math.exp2 %16 : vector<8x8xf32>
    %c0_11 = arith.constant 0 : index
    %c0_12 = arith.constant 0 : index
    %18 = vector.load %arg10[%c0_11, %c0_12] : memref<8x1xf32, #tpu.memory_space<vmem>>, vector<8x1xf32>
    %19 = arith.mulf %14, %18 : vector<8x1xf32>
    %cst_13 = arith.constant dense<0.000000e+00> : vector<8xf32>
    %20 = vector.multi_reduction <add>, %17, %cst_13 [1] : vector<8x8xf32> to vector<8xf32>
    %21 = vector.shape_cast %20 : vector<8xf32> to vector<8x1xf32>
    %22 = arith.addf %19, %21 : vector<8x1xf32>
    %c0_14 = arith.constant 0 : index
    %c0_15 = arith.constant 0 : index
    %23 = vector.load %arg10[%c0_14, %c0_15] : memref<8x1xf32, #tpu.memory_space<vmem>>, vector<8x1xf32>
    tpu.vector_store %arg10[%c0_14, %c0_15], %22 {strides = array<i32>} : memref<8x1xf32, #tpu.memory_space<vmem>>, vector<8x1xf32>,
    %c0_16 = arith.constant 0 : index
    %c0_17 = arith.constant 0 : index
    %24 = vector.load %arg11[%c0_16, %c0_17] : memref<8x32xf32, #tpu.memory_space<vmem>>, vector<8x32xf32>
    %25 = vector.broadcast %14 : vector<8x1xf32> to vector<8x32xf32>
    %26 = arith.mulf %25, %24 : vector<8x32xf32>
    %cst_18 = arith.constant dense<0.000000e+00> : vector<8x32xf32>
    %27 = tpu.matmul %17, %4, %cst_18 {dimension_numbers = #tpu.dot_dimension_numbers<[1], [0], [0], [1], [0, 0, 1, 1], [], []>} : vector<8x8xf32>, vector<8x32xf32>, vector<8x32xf32> -> vector<8x32xf32>
    %28 = arith.addf %26, %27 : vector<8x32xf32>
    %c0_19 = arith.constant 0 : index
    %c0_20 = arith.constant 0 : index
    %29 = vector.load %arg11[%c0_19, %c0_20] : memref<8x32xf32, #tpu.memory_space<vmem>>, vector<8x32xf32>
    tpu.vector_store %arg11[%c0_19, %c0_20], %28 {strides = array<i32>} : memref<8x32xf32, #tpu.memory_space<vmem>>, vector<8x32xf32>,
    %c0_21 = arith.constant 0 : index
    %c0_22 = arith.constant 0 : index
    %30 = vector.load %arg9[%c0_21, %c0_22] : memref<8x1xf32, #tpu.memory_space<vmem>>, vector<8x1xf32>
    tpu.vector_store %arg9[%c0_21, %c0_22], %12 {strides = array<i32>} : memref<8x1xf32, #tpu.memory_space<vmem>>, vector<8x1xf32>,
    %c0_i32_23 = arith.constant 0 : i32
    %31 = arith.cmpi eq, %arg2, %c0_i32_23 : i32
    %32 = arith.extui %31 : i1 to i32
    %c0_i32_24 = arith.constant 0 : i32
    %33 = arith.cmpi ne, %32, %c0_i32_24 : i32
    scf.if %33 {
      %c0_25 = arith.constant 0 : index
      %c0_26 = arith.constant 0 : index
      %34 = vector.load %arg10[%c0_25, %c0_26] : memref<8x1xf32, #tpu.memory_space<vmem>>, vector<8x1xf32>
      %cst_27 = arith.constant 1.000000e+00 : f32
      %35 = vector.broadcast %cst_27 : f32 to vector<8x1xf32>
      %36 = arith.divf %35, %34 : vector<8x1xf32>
      %c0_28 = arith.constant 0 : index
      %c0_29 = arith.constant 0 : index
      %37 = vector.load %arg11[%c0_28, %c0_29] : memref<8x32xf32, #tpu.memory_space<vmem>>, vector<8x32xf32>
      %38 = vector.broadcast %36 : vector<8x1xf32> to vector<8x32xf32>
      %39 = arith.mulf %37, %38 : vector<8x32xf32>
      %c0_30 = arith.constant 0 : index
      %c0_31 = arith.constant 0 : index
      %c0_32 = arith.constant 0 : index
      %40 = vector.load %arg7[%c0_30, %c0_31, %c0_32] : memref<1x8x32xf32, #tpu.memory_space<vmem>>, vector<1x8x32xf32>
      %41 = vector.shape_cast %40 : vector<1x8x32xf32> to vector<8x32xf32>
      %42 = vector.shape_cast %39 : vector<8x32xf32> to vector<1x8x32xf32>
      tpu.vector_store %arg7[%c0_30, %c0_31, %c0_32], %42 {strides = array<i32>} : memref<1x8x32xf32, #tpu.memory_space<vmem>>, vector<1x8x32xf32>,
    } else {
    }
    return
  }
  func.func @transform_0(%arg0: i32, %arg1: i32, %arg2: i32) -> (i32, i32, i32) {
    %c0_i32 = arith.constant 0 : i32
    %c0_i32_0 = arith.constant 0 : i32
    return %arg0, %arg1, %c0_i32 : i32, i32, i32
  }
  func.func @transform_1(%arg0: i32, %arg1: i32, %arg2: i32) -> (i32, i32, i32) {
    %c0_i32 = arith.constant 0 : i32
    %c0_i32_0 = arith.constant 0 : i32
    return %arg0, %arg2, %c0_i32 : i32, i32, i32
  }
  func.func @transform_2(%arg0: i32, %arg1: i32, %arg2: i32) -> (i32, i32) {
    %c0_i32 = arith.constant 0 : i32
    %c0_i32_0 = arith.constant 0 : i32
    %c0_i32_1 = arith.constant 0 : i32
    return %c0_i32, %c0_i32_0 : i32, i32
  }
  func.func @transform_3(%arg0: i32, %arg1: i32, %arg2: i32) -> (i32, i32) {
    %c0_i32 = arith.constant 0 : i32
    %c0_i32_0 = arith.constant 0 : i32
    %c0_i32_1 = arith.constant 0 : i32
    return %c0_i32, %c0_i32_0 : i32, i32
  }
  func.func @transform_4(%arg0: i32, %arg1: i32, %arg2: i32) -> (i32, i32, i32) {
    %c0_i32 = arith.constant 0 : i32
    %c0_i32_0 = arith.constant 0 : i32
    return %arg0, %arg1, %c0_i32 : i32, i32, i32
  }
}

module attributes {stable_mosaic.version = 11 : i64} {
  func.func @_fused_attn_kernel(%arg0: i32, %arg1: i32, %arg2: i32, %arg3: memref<1x8x32xf32, #tpu.memory_space<vmem>>, %arg4: memref<1x8x32xf32, #tpu.memory_space<vmem>>, %arg5: memref<32x32xf32, #tpu.memory_space<vmem>>, %arg6: memref<32x32xf32, #tpu.memory_space<vmem>>, %arg7: memref<1x8x32xf32, #tpu.memory_space<vmem>>, %arg8: memref<8x32xf32, #tpu.memory_space<vmem>>, %arg9: memref<8x1xf32, #tpu.memory_space<vmem>>, %arg10: memref<8x1xf32, #tpu.memory_space<vmem>>, %arg11: memref<8x32xf32, #tpu.memory_space<vmem>>) attributes {dimension_semantics = [#tpu.dimension_semantics<parallel>, #tpu.dimension_semantics<parallel>, #tpu.dimension_semantics<arbitrary>], iteration_bounds = array<i64: 2, 1, 1>, scalar_prefetch = 0 : i64, scratch_operands = 4 : i64, tpu.core_type = #tpu.core_type<tc>, window_params = [{transform_indices = @transform_0, window_bounds = array<i64: 1, 8, 32>}, {transform_indices = @transform_1, window_bounds = array<i64: 1, 8, 32>}, {pipeline_mode = #tpu.pipeline_mode<synchronous>, transform_indices = @transform_2, window_bounds = array<i64: 32, 32>}, {pipeline_mode = #tpu.pipeline_mode<synchronous>, transform_indices = @transform_3, window_bounds = array<i64: 32, 32>}, {transform_indices = @transform_4, window_bounds = array<i64: 1, 8, 32>}]} {
    %c0_i32 = arith.constant 0 : i32
    %0 = arith.cmpi eq, %arg2, %c0_i32 : i32
    %1 = arith.extui %0 : i1 to i32
    %c0_i32_0 = arith.constant 0 : i32
    %2 = arith.cmpi ne, %1, %c0_i32_0 : i32
    scf.if %2 {
      %c0_25 = arith.constant 0 : index
      %c0_26 = arith.constant 0 : index
      %c0_27 = arith.constant 0 : index
      %34 = vector.load %arg3[%c0_25, %c0_26, %c0_27] : memref<1x8x32xf32, #tpu.memory_space<vmem>>, vector<1x8x32xf32>
      %35 = vector.shape_cast %34 : vector<1x8x32xf32> to vector<8x32xf32>
      %c0_28 = arith.constant 0 : index
      %c0_29 = arith.constant 0 : index
      %36 = vector.load %arg5[%c0_28, %c0_29] : memref<32x32xf32, #tpu.memory_space<vmem>>, vector<32x32xf32>
      %cst_30 = arith.constant dense<0.000000e+00> : vector<8x32xf32>
      %37 = tpu.matmul %35, %36, %cst_30 {dimension_numbers = #tpu.dot_dimension_numbers<[1], [0], [0], [1], [0, 0, 1, 1], [], []>} : vector<8x32xf32>, vector<32x32xf32>, vector<8x32xf32> -> vector<8x32xf32>
      %cst_31 = arith.constant 0.255034864 : f32
      %38 = vector.broadcast %cst_31 : f32 to vector<8x32xf32>
      %39 = arith.mulf %37, %38 : vector<8x32xf32>
      %c0_32 = arith.constant 0 : index
      %c0_33 = arith.constant 0 : index
      %40 = vector.load %arg8[%c0_32, %c0_33] : memref<8x32xf32, #tpu.memory_space<vmem>>, vector<8x32xf32>
      tpu.vector_store %arg8[%c0_32, %c0_33], %39 {strides = array<i32>} : memref<8x32xf32, #tpu.memory_space<vmem>>, vector<8x32xf32>,
      %cst_34 = arith.constant 0xFF800000 : f32
      %41 = vector.broadcast %cst_34 : f32 to vector<8x1xf32>
      %c0_35 = arith.constant 0 : index
      %c0_36 = arith.constant 0 : index
      %42 = vector.load %arg9[%c0_35, %c0_36] : memref<8x1xf32, #tpu.memory_space<vmem>>, vector<8x1xf32>
      tpu.vector_store %arg9[%c0_35, %c0_36], %41 {strides = array<i32>} : memref<8x1xf32, #tpu.memory_space<vmem>>, vector<8x1xf32>,
      %cst_37 = arith.constant 0.000000e+00 : f32
      %43 = vector.broadcast %cst_37 : f32 to vector<8x1xf32>
      %c0_38 = arith.constant 0 : index
      %c0_39 = arith.constant 0 : index
      %44 = vector.load %arg10[%c0_38, %c0_39] : memref<8x1xf32, #tpu.memory_space<vmem>>, vector<8x1xf32>
      tpu.vector_store %arg10[%c0_38, %c0_39], %43 {strides = array<i32>} : memref<8x1xf32, #tpu.memory_space<vmem>>, vector<8x1xf32>,
      %cst_40 = arith.constant 0.000000e+00 : f32
      %45 = vector.broadcast %cst_40 : f32 to vector<8x32xf32>
      %c0_41 = arith.constant 0 : index
      %c0_42 = arith.constant 0 : index
      %46 = vector.load %arg11[%c0_41, %c0_42] : memref<8x32xf32, #tpu.memory_space<vmem>>, vector<8x32xf32>
      tpu.vector_store %arg11[%c0_41, %c0_42], %45 {strides = array<i32>} : memref<8x32xf32, #tpu.memory_space<vmem>>, vector<8x32xf32>,
    } else {
    }
    %c0 = arith.constant 0 : index
    %c0_1 = arith.constant 0 : index
    %c0_2 = arith.constant 0 : index
    %3 = vector.load %arg4[%c0, %c0_1, %c0_2] : memref<1x8x32xf32, #tpu.memory_space<vmem>>, vector<1x8x32xf32>
    %4 = vector.shape_cast %3 : vector<1x8x32xf32> to vector<8x32xf32>
    %c0_3 = arith.constant 0 : index
    %c0_4 = arith.constant 0 : index
    %5 = vector.load %arg6[%c0_3, %c0_4] : memref<32x32xf32, #tpu.memory_space<vmem>>, vector<32x32xf32>
    %cst = arith.constant dense<0.000000e+00> : vector<8x32xf32>
    %6 = tpu.matmul %4, %5, %cst {dimension_numbers = #tpu.dot_dimension_numbers<[1], [0], [0], [1], [0, 0, 1, 1], [], []>} : vector<8x32xf32>, vector<32x32xf32>, vector<8x32xf32> -> vector<8x32xf32>
    %c0_5 = arith.constant 0 : index
    %c0_6 = arith.constant 0 : index
    %7 = vector.load %arg8[%c0_5, %c0_6] : memref<8x32xf32, #tpu.memory_space<vmem>>, vector<8x32xf32>
    %cst_7 = arith.constant dense<0.000000e+00> : vector<8x8xf32>
    %8 = tpu.matmul %7, %6, %cst_7 {dimension_numbers = #tpu.dot_dimension_numbers<[1], [1], [0], [0], [0, 0, 1, 0], [], []>} : vector<8x32xf32>, vector<8x32xf32>, vector<8x8xf32> -> vector<8x8xf32>
    %c0_8 = arith.constant 0 : index
    %c0_9 = arith.constant 0 : index
    %9 = vector.load %arg9[%c0_8, %c0_9] : memref<8x1xf32, #tpu.memory_space<vmem>>, vector<8x1xf32>
    %cst_10 = arith.constant dense<0xFF800000> : vector<8xf32>
    %10 = vector.multi_reduction <maximumf>, %8, %cst_10 [1] : vector<8x8xf32> to vector<8xf32>
    %11 = vector.shape_cast %10 : vector<8xf32> to vector<8x1xf32>
    %12 = arith.maximumf %9, %11 : vector<8x1xf32>
    %13 = arith.subf %9, %12 : vector<8x1xf32>
    %14 = math.exp2 %13 : vector<8x1xf32>
    %15 = vector.broadcast %12 : vector<8x1xf32> to vector<8x8xf32>
    %16 = arith.subf %8, %15 : vector<8x8xf32>
    %17 = math.exp2 %16 : vector<8x8xf32>
    %c0_11 = arith.constant 0 : index
    %c0_12 = arith.constant 0 : index
    %18 = vector.load %arg10[%c0_11, %c0_12] : memref<8x1xf32, #tpu.memory_space<vmem>>, vector<8x1xf32>
    %19 = arith.mulf %14, %18 : vector<8x1xf32>
    %cst_13 = arith.constant dense<0.000000e+00> : vector<8xf32>
    %20 = vector.multi_reduction <add>, %17, %cst_13 [1] : vector<8x8xf32> to vector<8xf32>
    %21 = vector.shape_cast %20 : vector<8xf32> to vector<8x1xf32>
    %22 = arith.addf %19, %21 : vector<8x1xf32>
    %c0_14 = arith.constant 0 : index
    %c0_15 = arith.constant 0 : index
    %23 = vector.load %arg10[%c0_14, %c0_15] : memref<8x1xf32, #tpu.memory_space<vmem>>, vector<8x1xf32>
    tpu.vector_store %arg10[%c0_14, %c0_15], %22 {strides = array<i32>} : memref<8x1xf32, #tpu.memory_space<vmem>>, vector<8x1xf32>,
    %c0_16 = arith.constant 0 : index
    %c0_17 = arith.constant 0 : index
    %24 = vector.load %arg11[%c0_16, %c0_17] : memref<8x32xf32, #tpu.memory_space<vmem>>, vector<8x32xf32>
    %25 = vector.broadcast %14 : vector<8x1xf32> to vector<8x32xf32>
    %26 = arith.mulf %25, %24 : vector<8x32xf32>
    %cst_18 = arith.constant dense<0.000000e+00> : vector<8x32xf32>
    %27 = tpu.matmul %17, %4, %cst_18 {dimension_numbers = #tpu.dot_dimension_numbers<[1], [0], [0], [1], [0, 0, 1, 1], [], []>} : vector<8x8xf32>, vector<8x32xf32>, vector<8x32xf32> -> vector<8x32xf32>
    %28 = arith.addf %26, %27 : vector<8x32xf32>
    %c0_19 = arith.constant 0 : index
    %c0_20 = arith.constant 0 : index
    %29 = vector.load %arg11[%c0_19, %c0_20] : memref<8x32xf32, #tpu.memory_space<vmem>>, vector<8x32xf32>
    tpu.vector_store %arg11[%c0_19, %c0_20], %28 {strides = array<i32>} : memref<8x32xf32, #tpu.memory_space<vmem>>, vector<8x32xf32>,
    %c0_21 = arith.constant 0 : index
    %c0_22 = arith.constant 0 : index
    %30 = vector.load %arg9[%c0_21, %c0_22] : memref<8x1xf32, #tpu.memory_space<vmem>>, vector<8x1xf32>
    tpu.vector_store %arg9[%c0_21, %c0_22], %12 {strides = array<i32>} : memref<8x1xf32, #tpu.memory_space<vmem>>, vector<8x1xf32>,
    %c0_i32_23 = arith.constant 0 : i32
    %31 = arith.cmpi eq, %arg2, %c0_i32_23 : i32
    %32 = arith.extui %31 : i1 to i32
    %c0_i32_24 = arith.constant 0 : i32
    %33 = arith.cmpi ne, %32, %c0_i32_24 : i32
    scf.if %33 {
      %c0_25 = arith.constant 0 : index
      %c0_26 = arith.constant 0 : index
      %34 = vector.load %arg10[%c0_25, %c0_26] : memref<8x1xf32, #tpu.memory_space<vmem>>, vector<8x1xf32>
      %cst_27 = arith.constant 1.000000e+00 : f32
      %35 = vector.broadcast %cst_27 : f32 to vector<8x1xf32>
      %36 = arith.divf %35, %34 : vector<8x1xf32>
      %c0_28 = arith.constant 0 : index
      %c0_29 = arith.constant 0 : index
      %37 = vector.load %arg11[%c0_28, %c0_29] : memref<8x32xf32, #tpu.memory_space<vmem>>, vector<8x32xf32>
      %38 = vector.broadcast %36 : vector<8x1xf32> to vector<8x32xf32>
      %39 = arith.mulf %37, %38 : vector<8x32xf32>
      %c0_30 = arith.constant 0 : index
      %c0_31 = arith.constant 0 : index
      %c0_32 = arith.constant 0 : index
      %40 = vector.load %arg7[%c0_30, %c0_31, %c0_32] : memref<1x8x32xf32, #tpu.memory_space<vmem>>, vector<1x8x32xf32>
      %41 = vector.shape_cast %40 : vector<1x8x32xf32> to vector<8x32xf32>
      %42 = vector.shape_cast %39 : vector<8x32xf32> to vector<1x8x32xf32>
      tpu.vector_store %arg7[%c0_30, %c0_31, %c0_32], %42 {strides = array<i32>} : memref<1x8x32xf32, #tpu.memory_space<vmem>>, vector<1x8x32xf32>,
    } else {
    }
    return
  }
  func.func @transform_0(%arg0: i32, %arg1: i32, %arg2: i32) -> (i32, i32, i32) {
    %c0_i32 = arith.constant 0 : i32
    %c0_i32_0 = arith.constant 0 : i32
    return %arg0, %arg1, %c0_i32 : i32, i32, i32
  }
  func.func @transform_1(%arg0: i32, %arg1: i32, %arg2: i32) -> (i32, i32, i32) {
    %c0_i32 = arith.constant 0 : i32
    %c0_i32_0 = arith.constant 0 : i32
    return %arg0, %arg2, %c0_i32 : i32, i32, i32
  }
  func.func @transform_2(%arg0: i32, %arg1: i32, %arg2: i32) -> (i32, i32) {
    %c0_i32 = arith.constant 0 : i32
    %c0_i32_0 = arith.constant 0 : i32
    %c0_i32_1 = arith.constant 0 : i32
    return %c0_i32, %c0_i32_0 : i32, i32
  }
  func.func @transform_3(%arg0: i32, %arg1: i32, %arg2: i32) -> (i32, i32) {
    %c0_i32 = arith.constant 0 : i32
    %c0_i32_0 = arith.constant 0 : i32
    %c0_i32_1 = arith.constant 0 : i32
    return %c0_i32, %c0_i32_0 : i32, i32
  }
  func.func @transform_4(%arg0: i32, %arg1: i32, %arg2: i32) -> (i32, i32, i32) {
    %c0_i32 = arith.constant 0 : i32
    %c0_i32_0 = arith.constant 0 : i32
    return %arg0, %arg1, %c0_i32 : i32, i32, i32
  }
}

</mosaic_0001>

<llo_original>
// kernel: tpu_custom_call.1
$region0: #{tpu_custom_call.1}
  #allocation0 [shape = 'u32[]', space=smem, size = 0x4, offset = 0x4, fixed_abs, tag = 'smem constant byte address 0x4 - core index']
  #allocation1 [shape = 'u32[144,128]{1,0:T(1,128)}', space=vmem, size = 0x12000, scoped, tag = 'internal scratch']
  #allocation2 [shape = 'f32[8,32]{1,0:T(8,128)}', space=vmem, size = 0x1000, scoped, tag = 'scratch operand']
  #allocation3 [shape = 'f32[8,1]{1,0:T(8,128)}', space=vmem, size = 0x1000, scoped, tag = 'scratch operand']
  #allocation4 [shape = 'f32[8,1]{1,0:T(8,128)}', space=vmem, size = 0x1000, scoped, tag = 'scratch operand']
  #allocation5 [shape = 'f32[8,32]{1,0:T(8,128)}', space=vmem, size = 0x1000, scoped, tag = 'scratch operand']
  %s0 = inlined_call_operand.hbm [shape: f32[2,8,32], index: 0, kind: input, shape index: {}]
  %s1 = inlined_call_operand.hbm [shape: f32[2,8,32], index: 1, kind: input, shape index: {}]
  %s2 = inlined_call_operand.hbm [shape: f32[32,32], index: 2, kind: input, shape index: {}]
  %s3 = inlined_call_operand.hbm [shape: f32[32,32], index: 3, kind: input, shape index: {}]
  %s4 = inlined_call_operand.hbm [shape: f32[2,8,32], index: 4, kind: output, shape index: {}]
  %s5 = sld [smem:[#allocation0]]
  $region73: #{tpu_custom_call.1} parent=0
    _
  %s7 = ssub.s32 1, %s5
  %s8 = scalar_select 0, %s7, %s5
  $region1: #{tpu_custom_call.1} parent=0
    #allocation6 [shape = 'u8[8192]{0}', space=vmem, size = 0x2000, scoped, tag = 'input window, operand 0']
    #allocation7 [shape = 's32[2]{0}', space=sflag, size = 0x8, scoped, tag = 'scoped memory for tpu_custom_call.1']
    #allocation8 [shape = 's32[2]{0}', space=sflag, size = 0x8, scoped, tag = 'scoped memory for tpu_custom_call.1']
    #allocation9 [shape = 'u8[8192]{0}', space=vmem, size = 0x2000, scoped, tag = 'input window, operand 1']
    #allocation10 [shape = 's32[2]{0}', space=sflag, size = 0x8, scoped, tag = 'scoped memory for tpu_custom_call.1']
    #allocation11 [shape = 'u8[16384]{0}', space=vmem, size = 0x4000, scoped, tag = 'input window, operand 2, single buffered']
    #allocation12 [shape = 'u8[16384]{0}', space=vmem, size = 0x4000, scoped, tag = 'input window, operand 3, single buffered']
    #allocation13 [shape = 's32[1]{0}', space=sflag, size = 0x4, scoped, tag = 'scoped memory for tpu_custom_call.1']
    #allocation14 [shape = 'u8[8192]{0}', space=vmem, size = 0x2000, scoped, tag = 'output window, operand 0']
    %9 = vsyncpa [#allocation7], 0
    %s10 = scalar_lea.sflag [#allocation7], 1
    %11 = vsyncpa %s10, 0
    %12 = vsyncpa [#allocation10], 0
    %s13 = scalar_lea.sflag [#allocation10], 1
    %14 = vsyncpa %s13, 0
    %15 = vsyncpa [#allocation13], 0
    %16 = vsyncpa [#allocation8], 0
    %s17 = scalar_lea.sflag [#allocation8], 1
    %18 = vsyncpa %s17, 0
    loop: start=0, step=1, limit=4
    $region2: #{tpu_custom_call.1} parent=1 // loop_pre_header
      _
    $region3: #{tpu_custom_call.1} parent=1 // loop_header
      %s20 = sphi 0, %s24
      %p21 = scmp.ge.s32.totalorder %s20, 4
      %s27 = sphi 0, %s46
      %s28 = sphi 0, %s42
      %s29 = sphi 0, %s38
      %s30 = sphi 0, %s27
      %s31 = sphi 0, %s28
      %s32 = sphi 0, %s29
      %s33 = sphi 0, %s30
      %s34 = sphi 0, %s31
      %s35 = sphi 0, %s32
      %s51 = sphi 0, %s53
      %s54 = sphi 0, %s51
      %s55 = sphi 0, %s54
      %s71 = sphi 0, %s55
      %s79 = sphi 0, %s81
      %s82 = sphi 0, %s79
      %s83 = sphi 0, %s82
      %s99 = sphi 0, %s83
      %s103 = sphi 0, %s103
      %s105 = sphi 0, %s103
      %s106 = sphi 0, %s105
      %s120 = sphi 0, %s106
      %s124 = sphi 0, %s124
      %s126 = sphi 0, %s124
      %s127 = sphi 0, %s126
      %s141 = sphi 0, %s127
      %s149 = sphi 0, %s151
      %s152 = sphi 0, %s149
      %s153 = sphi 0, %s152
      %s169 = sphi 0, %s153
    $region4: #{tpu_custom_call.1} parent=1 // loop_header_branch
      %23 = sbr.rel (%p21) target = $region8
    $region5: #{tpu_custom_call.1} parent=1 // loop_body
      %s25 = ssub.s32 %s20, 1
      %s26 = ssub.s32 %s20, 2
      %s36 = sadd.s32 1, %s29
      %p37 = scmp.ge.s32.totalorder %s36, 1
      %s38 = scalar_select %p37, 0, %s36
      %s39 = sadd.s32 1, %s28
      %s40 = scalar_select %p37, %s39, %s28
      %p41 = scmp.ge.s32.totalorder %s40, 1
      %s42 = scalar_select %p41, 0, %s40
      %s43 = sadd.s32 1, %s27
      %s44 = scalar_select %p41, %s43, %s27
      %p45 = scmp.ge.s32.totalorder %s44, 2
      %s46 = scalar_select %p45, 0, %s44
      %s47 = ssub.s32 %s27, %s46
      %s48 = ssub.s32 %s28, %s42
      %s49 = sor.u32 %s47, %s48
      %p50 = scmp.eq.s32.totalorder %s49, 0
      %s52 = sadd.s32 %s51, 1
      %s53 = scalar_select %p50, %s51, %s52
      %p56 = pneg %p50
      %p57 = scmp.eq.s32.totalorder %s20, 1
      %p58 = por %p56, %p57
      %p59 = scmp.ne.s32.totalorder %s51, %s54
      %p60 = scmp.eq.s32.totalorder %s20, 0
      %p61 = por %p59, %p60
      %p62 = scmp.ne.s32.totalorder %s51, %s54
      %p63 = scmp.eq.s32.totalorder %s25, 1
      %p64 = por %p62, %p63
      %p65 = scmp.ne.s32.totalorder %s54, %s55
      %p66 = scmp.eq.s32.totalorder %s25, 0
      %p67 = por %p65, %p66
      %p68 = scmp.ne.s32.totalorder %s54, %s55
      %p69 = scmp.eq.s32.totalorder %s26, 1
      %p70 = por %p68, %p69
      %p72 = scmp.ne.s32.totalorder %s55, %s71
      %p73 = scmp.eq.s32.totalorder %s26, 0
      %p74 = por %p72, %p73
      %s75 = ssub.s32 %s27, %s46
      %s76 = ssub.s32 %s29, %s38
      %s77 = sor.u32 %s75, %s76
      %p78 = scmp.eq.s32.totalorder %s77, 0
      %s80 = sadd.s32 %s79, 1
      %s81 = scalar_select %p78, %s79, %s80
      %p84 = pneg %p78
      %p85 = scmp.eq.s32.totalorder %s20, 1
      %p86 = por %p84, %p85
      %p87 = scmp.ne.s32.totalorder %s79, %s82
      %p88 = scmp.eq.s32.totalorder %s20, 0
      %p89 = por %p87, %p88
      %p90 = scmp.ne.s32.totalorder %s79, %s82
      %p91 = scmp.eq.s32.totalorder %s25, 1
      %p92 = por %p90, %p91
      %p93 = scmp.ne.s32.totalorder %s82, %s83
      %p94 = scmp.eq.s32.totalorder %s25, 0
      %p95 = por %p93, %p94
      %p96 = scmp.ne.s32.totalorder %s82, %s83
      %p97 = scmp.eq.s32.totalorder %s26, 1
      %p98 = por %p96, %p97
      %p100 = scmp.ne.s32.totalorder %s83, %s99
      %p101 = scmp.eq.s32.totalorder %s26, 0
      %p102 = por %p100, %p101
      %s104 = sadd.s32 %s103, 1
      %p107 = scmp.eq.s32.totalorder %s20, 1
      %p108 = scmp.ne.s32.totalorder %s103, %s105
      %p109 = scmp.eq.s32.totalorder %s20, 0
      %p110 = por %p108, %p109
      %p111 = scmp.ne.s32.totalorder %s103, %s105
      %p112 = scmp.eq.s32.totalorder %s25, 1
      %p113 = por %p111, %p112
      %p114 = scmp.ne.s32.totalorder %s105, %s106
      %p115 = scmp.eq.s32.totalorder %s25, 0
      %p116 = por %p114, %p115
      %p117 = scmp.ne.s32.totalorder %s105, %s106
      %p118 = scmp.eq.s32.totalorder %s26, 1
      %p119 = por %p117, %p118
      %p121 = scmp.ne.s32.totalorder %s106, %s120
      %p122 = scmp.eq.s32.totalorder %s26, 0
      %p123 = por %p121, %p122
      %s125 = sadd.s32 %s124, 1
      %p128 = scmp.eq.s32.totalorder %s20, 1
      %p129 = scmp.ne.s32.totalorder %s124, %s126
      %p130 = scmp.eq.s32.totalorder %s20, 0
      %p131 = por %p129, %p130
      %p132 = scmp.ne.s32.totalorder %s124, %s126
      %p133 = scmp.eq.s32.totalorder %s25, 1
      %p134 = por %p132, %p133
      %p135 = scmp.ne.s32.totalorder %s126, %s127
      %p136 = scmp.eq.s32.totalorder %s25, 0
      %p137 = por %p135, %p136
      %p138 = scmp.ne.s32.totalorder %s126, %s127
      %p139 = scmp.eq.s32.totalorder %s26, 1
      %p140 = por %p138, %p139
      %p142 = scmp.ne.s32.totalorder %s127, %s141
      %p143 = scmp.eq.s32.totalorder %s26, 0
      %p144 = por %p142, %p143
      %s145 = ssub.s32 %s27, %s46
      %s146 = ssub.s32 %s28, %s42
      %s147 = sor.u32 %s145, %s146
      %p148 = scmp.eq.s32.totalorder %s147, 0
      %s150 = sadd.s32 %s149, 1
      %s151 = scalar_select %p148, %s149, %s150
      %p154 = pneg %p148
      %p155 = scmp.eq.s32.totalorder %s20, 1
      %p156 = por %p154, %p155
      %p157 = scmp.ne.s32.totalorder %s149, %s152
      %p158 = scmp.eq.s32.totalorder %s20, 0
      %p159 = por %p157, %p158
      %p160 = scmp.ne.s32.totalorder %s149, %s152
      %p161 = scmp.eq.s32.totalorder %s25, 1
      %p162 = por %p160, %p161
      %p163 = scmp.ne.s32.totalorder %s152, %s153
      %p164 = scmp.eq.s32.totalorder %s25, 0
      %p165 = por %p163, %p164
      %p166 = scmp.ne.s32.totalorder %s152, %s153
      %p167 = scmp.eq.s32.totalorder %s26, 1
      %p168 = por %p166, %p167
      %p170 = scmp.ne.s32.totalorder %s153, %s169
      %p171 = scmp.eq.s32.totalorder %s26, 0
      %p172 = por %p170, %p171
      %p173 = scmp.le.s32.totalorder 1, %s20
      %p174 = scmp.lt.s32.totalorder %s20, 3
      %p175 = pnand %p173, %p174
      %p176 = pneg %p175
      // Predicated region
      $region9: #{tpu_custom_call.1} parent=5 // pred_check
        _
      $region10: #{tpu_custom_call.1} parent=5 // pred_check_branch
        %178 = sbr.rel (%p175) target = $region12
      $region11: #{tpu_custom_call.1} parent=5 // pred_region
        %s179 = ssub.s32 %s20, 1
        // Predicated region
        $region13: #{tpu_custom_call.1} parent=11 // pred_check
          %p180 = pneg %p116
        $region14: #{tpu_custom_call.1} parent=11 // pred_check_branch
          %182 = sbr.rel (%p180) target = $region16
        $region15: #{tpu_custom_call.1} parent=11 // pred_region
          %s184 = ssub.s32 512, 512
          %185 = vsyncadd [#allocation10], %s184
          %s186 = sshll.u32 [#allocation11], 4
          %s187 = int_to_ptr.vmem [resolvable:$true] %s186
          %192 = dma.hbm_to_vmem [thread:$0]  %s2, 512, %s187, [#allocation10], 128, 128, 8
        $region16: #{tpu_custom_call.1} parent=11 // pred_fallthru
          _
        // Predicated region
        $region17: #{tpu_custom_call.1} parent=11 // pred_check
          %p193 = pneg %p137
        $region18: #{tpu_custom_call.1} parent=11 // pred_check_branch
          %195 = sbr.rel (%p193) target = $region20
        $region19: #{tpu_custom_call.1} parent=11 // pred_region
          %s197 = ssub.s32 512, 512
          %198 = vsyncadd [#allocation13], %s197
          %s199 = sshll.u32 [#allocation12], 4
          %s200 = int_to_ptr.vmem [resolvable:$true] %s199
          %205 = dma.hbm_to_vmem [thread:$0]  %s3, 512, %s200, [#allocation13], 128, 128, 8
        $region20: #{tpu_custom_call.1} parent=11 // pred_fallthru
          _
      $region12: #{tpu_custom_call.1} parent=5 // pred_fallthru
        _
      %p206 = scmp.lt.s32.totalorder %s20, 2
      // Predicated region
      $region21: #{tpu_custom_call.1} parent=5 // pred_check
        %p207 = pneg %p206
      $region22: #{tpu_custom_call.1} parent=5 // pred_check_branch
        %209 = sbr.rel (%p207) target = $region24
      $region23: #{tpu_custom_call.1} parent=5 // pred_region
        // Predicated region
        $region25: #{tpu_custom_call.1} parent=23 // pred_check
          %p210 = pneg %p61
        $region26: #{tpu_custom_call.1} parent=23 // pred_check_branch
          %212 = sbr.rel (%p210) target = $region28
        $region27: #{tpu_custom_call.1} parent=23 // pred_region
          %s213 = sand.u32 %s51, 1
          %s214 = scalar_lea.sflag [#allocation7], %s213
          %s215 = sand.u32 %s51, 1
          %s216 = smul.addr %s215, 8
          %s217 = scalar_lea.vmem [#allocation6], %s216
          %s219 = ssub.s32 128, 128
          %220 = vsyncadd %s214, %s219
          %s221 = sadd.s32 %s28, %s27
          %s222 = smul.addr %s221, 128
          %s223 = scalar_lea.hbm %s0, %s222
          %s225 = sshll.u32 %s217, 4
          %s226 = int_to_ptr.vmem [resolvable:$true] %s225
          %228 = dma.hbm_to_vmem [thread:$0]  %s223, 128, %s226, %s214
        $region28: #{tpu_custom_call.1} parent=23 // pred_fallthru
          _
        // Predicated region
        $region29: #{tpu_custom_call.1} parent=23 // pred_check
          %p229 = pneg %p89
        $region30: #{tpu_custom_call.1} parent=23 // pred_check_branch
          %231 = sbr.rel (%p229) target = $region32
        $region31: #{tpu_custom_call.1} parent=23 // pred_region
          %s232 = sand.u32 %s20, 1
          %s233 = scalar_lea.sflag [#allocation10], %s232
          %s234 = sand.u32 %s79, 1
          %s235 = smul.addr %s234, 8
          %s236 = scalar_lea.vmem [#allocation9], %s235
          %s238 = ssub.s32 128, 128
          %239 = vsyncadd %s233, %s238
          %s240 = sadd.s32 %s29, %s27
          %s241 = smul.addr %s240, 128
          %s242 = scalar_lea.hbm %s1, %s241
          %s244 = sshll.u32 %s236, 4
          %s245 = int_to_ptr.vmem [resolvable:$true] %s244
          %247 = dma.hbm_to_vmem [thread:$0]  %s242, 128, %s245, %s233
        $region32: #{tpu_custom_call.1} parent=23 // pred_fallthru
          _
      $region24: #{tpu_custom_call.1} parent=5 // pred_fallthru
        _
      %p248 = scmp.le.s32.totalorder 1, %s20
      %p249 = scmp.lt.s32.totalorder %s20, 3
      %p250 = pnand %p248, %p249
      %p251 = pneg %p250
      // Predicated region
      $region33: #{tpu_custom_call.1} parent=5 // pred_check
        _
      $region34: #{tpu_custom_call.1} parent=5 // pred_check_branch
        %253 = sbr.rel (%p250) target = $region36
      $region35: #{tpu_custom_call.1} parent=5 // pred_region
        %s254 = ssub.s32 %s20, 1
        %s255 = sand.u32 %s54, 1
        %s256 = scalar_lea.sflag [#allocation7], %s255
        %s257 = sand.u32 %s54, 1
        %s258 = smul.addr %s257, 8
        %s259 = scalar_lea.vmem [#allocation6], %s258
        // Predicated region
        $region37: #{tpu_custom_call.1} parent=35 // pred_check
          %p260 = pneg %p67
        $region38: #{tpu_custom_call.1} parent=35 // pred_check_branch
          %262 = sbr.rel (%p260) target = $region40
        $region39: #{tpu_custom_call.1} parent=35 // pred_region
          %263 = dma.done %s256, 128
        $region40: #{tpu_custom_call.1} parent=35 // pred_fallthru
          _
        %s264 = sand.u32 %s25, 1
        %s265 = scalar_lea.sflag [#allocation10], %s264
        %s266 = sand.u32 %s82, 1
        %s267 = smul.addr %s266, 8
        %s268 = scalar_lea.vmem [#allocation9], %s267
        // Predicated region
        $region41: #{tpu_custom_call.1} parent=35 // pred_check
          %p269 = pneg %p95
        $region42: #{tpu_custom_call.1} parent=35 // pred_check_branch
          %271 = sbr.rel (%p269) target = $region44
        $region43: #{tpu_custom_call.1} parent=35 // pred_region
          %272 = dma.done %s265, 128
        $region44: #{tpu_custom_call.1} parent=35 // pred_fallthru
          _
        // Predicated region
        $region45: #{tpu_custom_call.1} parent=35 // pred_check
          %p273 = pneg %p116
        $region46: #{tpu_custom_call.1} parent=35 // pred_check_branch
          %275 = sbr.rel (%p273) target = $region48
        $region47: #{tpu_custom_call.1} parent=35 // pred_region
          %276 = dma.done [#allocation10], 512
        $region48: #{tpu_custom_call.1} parent=35 // pred_fallthru
          _
        // Predicated region
        $region49: #{tpu_custom_call.1} parent=35 // pred_check
          %p277 = pneg %p137
        $region50: #{tpu_custom_call.1} parent=35 // pred_check_branch
          %279 = sbr.rel (%p277) target = $region52
        $region51: #{tpu_custom_call.1} parent=35 // pred_region
          %280 = dma.done [#allocation13], 512
        $region52: #{tpu_custom_call.1} parent=35 // pred_fallthru
          _
        %s281 = sand.u32 %s54, 1
        %s282 = scalar_lea.sflag [#allocation7], %s281
        %s283 = sand.u32 %s54, 1
        %s284 = smul.addr %s283, 8
        %s285 = scalar_lea.vmem [#allocation6], %s284
        %p286 = pneg %p67
        %p287 = pneg %p64
        %s288 = sand.u32 %s25, 1
        %s289 = scalar_lea.sflag [#allocation10], %s288
        %s290 = sand.u32 %s82, 1
        %s291 = smul.addr %s290, 8
        %s292 = scalar_lea.vmem [#allocation9], %s291
        %p293 = pneg %p95
        %p294 = pneg %p92
        %p295 = pneg %p116
        %p296 = pneg %p113
        %p297 = pneg %p137
        %p298 = pneg %p134
        %p299 = pneg %p165
        %p300 = pneg %p162
        %s301 = sand.u32 %s152, 1
        %s302 = scalar_lea.sflag [#allocation8], %s301
        %s303 = sand.u32 %s152, 1
        %s304 = smul.addr %s303, 8
        %s305 = scalar_lea.vmem [#allocation14], %s304
        %p306 = scmp.eq.s32.totalorder %s32, 0
        // Predicated region
        $region53: #{tpu_custom_call.1} parent=35 // pred_check
          %p307 = pneg %p306
        $region54: #{tpu_custom_call.1} parent=35 // pred_check_branch
          %309 = sbr.rel (%p307) target = $region56
        $region55: #{tpu_custom_call.1} parent=35 // pred_region
          %v310 = vld [vmem:[%s259] sm:$0xff]
          %v311 = vld [vmem:[#allocation11] sm:$0xff]
          %v312 = vld [vmem:[#allocation11 + $0x8] sm:$0xff]
          %v313 = vld [vmem:[#allocation11 + $0x10] sm:$0xff]
          %v314 = vld [vmem:[#allocation11 + $0x18] sm:$0xff]
          %vm315 = vcmask 261120
          %v317 = vsel %vm315, %v310, 0
          %319 = vmatprep.subr.mxu0 0.0
          %320 = vmatpush1.msra.mxu0 %v311
          %321 = vmatprep.subr.mxu0 0.0
          %322 = vmatpush1.msra.mxu0 %v312
          %323 = vmatprep.subr.mxu0 0.0
          %324 = vmatpush1.msra.mxu0 %v313
          %325 = vmatprep.subr.mxu0 0.0
          %326 = vmatpush1.msra.mxu0 %v314
          %327 = vmatprep.subr.mxu0 0.0
          %328 = vmatpush1.msra.mxu0 0.0
          %329 = vmatprep.subr.mxu0 0.0
          %330 = vmatpush1.msra.mxu0 0.0
          %331 = vmatprep.subr.mxu0 0.0
          %332 = vmatpush1.msra.mxu0 0.0
          %333 = vmatprep.subr.mxu0 0.0
          %334 = vmatpush1.msra.mxu0 0.0
          %335 = vmatprep.subr.mxu0 0.0
          %336 = vmatpush1.msra.mxu0 0.0
          %337 = vmatprep.subr.mxu0 0.0
          %338 = vmatpush1.msra.mxu0 0.0
          %339 = vmatprep.subr.mxu0 0.0
          %340 = vmatpush1.msra.mxu0 0.0
          %341 = vmatprep.subr.mxu0 0.0
          %342 = vmatpush1.msra.mxu0 0.0
          %343 = vmatprep.subr.mxu0 0.0
          %344 = vmatpush1.msra.mxu0 0.0
          %345 = vmatprep.subr.mxu0 0.0
          %346 = vmatpush1.msra.mxu0 0.0
          %347 = vmatprep.subr.mxu0 0.0
          %348 = vmatpush1.msra.mxu0 0.0
          %349 = vmatprep.subr.mxu0 0.0
          %350 = vmatpush1.msra.mxu0 0.0
          %351 = vmatprep.subr.mxu0 0.0
          %352 = vmatpush1.msra.mxu0 0.0
          %353 = vmatprep.subr.mxu0 0.0
          %354 = vmatpush1.msra.mxu0 0.0
          %355 = vmatprep.subr.mxu0 0.0
          %356 = vmatpush1.msra.mxu0 0.0
          %357 = vmatprep.subr.mxu0 0.0
          %358 = vmatpush1.msra.mxu0 0.0
          %359 = vmatprep.subr.mxu0 0.0
          %360 = vmatpush1.msra.mxu0 0.0
          %361 = vmatprep.subr.mxu0 0.0
          %362 = vmatpush1.msra.mxu0 0.0
          %363 = vmatprep.subr.mxu0 0.0
          %364 = vmatpush1.msra.mxu0 0.0
          %365 = vmatprep.subr.mxu0 0.0
          %366 = vmatpush1.msra.mxu0 0.0
          %367 = vmatprep.subr.mxu0 0.0
          %368 = vmatpush1.msra.mxu0 0.0
          %369 = vmatprep.subr.mxu0 0.0
          %370 = vmatpush1.msra.mxu0 0.0
          %371 = vmatprep.subr.mxu0 0.0
          %372 = vmatpush1.msra.mxu0 0.0
          %373 = vmatprep.subr.mxu0 0.0
          %374 = vmatpush1.msra.mxu0 0.0
          %375 = vmatprep.subr.mxu0 0.0
          %376 = vmatpush1.msra.mxu0 0.0
          %377 = vmatprep.subr.mxu0 0.0
          %378 = vmatpush1.msra.mxu0 0.0
          %379 = vmatprep.subr.mxu0 0.0
          %380 = vmatpush1.msra.mxu0 0.0
          %381 = vmatprep.subr.mxu0 0.0
          %382 = vmatpush1.msra.mxu0 0.0
          %383 = vmatprep.mubr.f32.mxu0 0.0
          %384 = vmatmul.mubr.f32.gmra.mrb[0].mxu0 %v317
          %v385 = vpop.f32.mrb[0].mxu0
          %v386 = vadd.f32 0.0, %v385
          %v387 = vpop.f32.mrb[0].mxu0
          %388 = vdwg.mxu0
          %v389 = vmul.f32 %v386, 0.25503486
          %390 = vst.msk [vmem:[#allocation2] sm:$0xff] %vm315, %v389
          %vm391 = vcmask 7168
          %392 = vst.msk [vmem:[#allocation3] sm:$0xff] %vm391, -inf
          %393 = vst.msk [vmem:[#allocation4] sm:$0xff] %vm391, 0.0
          %394 = vst.msk [vmem:[#allocation5] sm:$0xff] %vm315, 0.0
        $region56: #{tpu_custom_call.1} parent=35 // pred_fallthru
          _
        %v395 = vld [vmem:[%s268] sm:$0xff]
        %v396 = vld [vmem:[#allocation12] sm:$0xff]
        %v397 = vld [vmem:[#allocation12 + $0x8] sm:$0xff]
        %v398 = vld [vmem:[#allocation12 + $0x10] sm:$0xff]
        %v399 = vld [vmem:[#allocation12 + $0x18] sm:$0xff]
        %vm400 = vcmask 261120
        %v402 = vsel %vm400, %v395, 0
        %404 = vmatprep.subr.mxu0 0.0
        %405 = vmatpush1.msra.mxu0 %v396
        %406 = vmatprep.subr.mxu0 0.0
        %407 = vmatpush1.msra.mxu0 %v397
        %408 = vmatprep.subr.mxu0 0.0
        %409 = vmatpush1.msra.mxu0 %v398
        %410 = vmatprep.subr.mxu0 0.0
        %411 = vmatpush1.msra.mxu0 %v399
        %412 = vmatprep.subr.mxu0 0.0
        %413 = vmatpush1.msra.mxu0 0.0
        %414 = vmatprep.subr.mxu0 0.0
        %415 = vmatpush1.msra.mxu0 0.0
        %416 = vmatprep.subr.mxu0 0.0
        %417 = vmatpush1.msra.mxu0 0.0
        %418 = vmatprep.subr.mxu0 0.0
        %419 = vmatpush1.msra.mxu0 0.0
        %420 = vmatprep.subr.mxu0 0.0
        %421 = vmatpush1.msra.mxu0 0.0
        %422 = vmatprep.subr.mxu0 0.0
        %423 = vmatpush1.msra.mxu0 0.0
        %424 = vmatprep.subr.mxu0 0.0
        %425 = vmatpush1.msra.mxu0 0.0
        %426 = vmatprep.subr.mxu0 0.0
        %427 = vmatpush1.msra.mxu0 0.0
        %428 = vmatprep.subr.mxu0 0.0
        %429 = vmatpush1.msra.mxu0 0.0
        %430 = vmatprep.subr.mxu0 0.0
        %431 = vmatpush1.msra.mxu0 0.0
        %432 = vmatprep.subr.mxu0 0.0
        %433 = vmatpush1.msra.mxu0 0.0
        %434 = vmatprep.subr.mxu0 0.0
        %435 = vmatpush1.msra.mxu0 0.0
        %436 = vmatprep.subr.mxu0 0.0
        %437 = vmatpush1.msra.mxu0 0.0
        %438 = vmatprep.subr.mxu0 0.0
        %439 = vmatpush1.msra.mxu0 0.0
        %440 = vmatprep.subr.mxu0 0.0
        %441 = vmatpush1.msra.mxu0 0.0
        %442 = vmatprep.subr.mxu0 0.0
        %443 = vmatpush1.msra.mxu0 0.0
        %444 = vmatprep.subr.mxu0 0.0
        %445 = vmatpush1.msra.mxu0 0.0
        %446 = vmatprep.subr.mxu0 0.0
        %447 = vmatpush1.msra.mxu0 0.0
        %448 = vmatprep.subr.mxu0 0.0
        %449 = vmatpush1.msra.mxu0 0.0
        %450 = vmatprep.subr.mxu0 0.0
        %451 = vmatpush1.msra.mxu0 0.0
        %452 = vmatprep.subr.mxu0 0.0
        %453 = vmatpush1.msra.mxu0 0.0
        %454 = vmatprep.subr.mxu0 0.0
        %455 = vmatpush1.msra.mxu0 0.0
        %456 = vmatprep.subr.mxu0 0.0
        %457 = vmatpush1.msra.mxu0 0.0
        %458 = vmatprep.subr.mxu0 0.0
        %459 = vmatpush1.msra.mxu0 0.0
        %460 = vmatprep.subr.mxu0 0.0
        %461 = vmatpush1.msra.mxu0 0.0
        %462 = vmatprep.subr.mxu0 0.0
        %463 = vmatpush1.msra.mxu0 0.0
        %464 = vmatprep.subr.mxu0 0.0
        %465 = vmatpush1.msra.mxu0 0.0
        %466 = vmatprep.subr.mxu0 0.0
        %467 = vmatpush1.msra.mxu0 0.0
        %468 = vmatprep.mubr.f32.mxu0 0.0
        %469 = vmatmul.mubr.f32.gmra.mrb[0].mxu0 %v402
        %v470 = vpop.f32.mrb[0].mxu0
        %v471 = vadd.f32 0.0, %v470
        %v472 = vpop.f32.mrb[0].mxu0
        %473 = vdwg.mxu0
        %v474 = vld [vmem:[#allocation2] sm:$0xff]
        %v476 = vsel %vm400, %v474, 0
        %v479 = vsel %vm400, %v471, 0
        %481 = vmatprep.subr.mxu0 0.0
        %482 = vmatpush1.xpose.msra.mxu0 %v479
        %483 = vmatprep.subr.mxu0 0.0
        %484 = vmatpush1.xpose.msra.mxu0 0.0
        %485 = vmatprep.subr.mxu0 0.0
        %486 = vmatpush1.xpose.msra.mxu0 0.0
        %487 = vmatprep.subr.mxu0 0.0
        %488 = vmatpush1.xpose.msra.mxu0 0.0
        %489 = vmatprep.subr.mxu0 0.0
        %490 = vmatpush1.xpose.msra.mxu0 0.0
        %491 = vmatprep.subr.mxu0 0.0
        %492 = vmatpush1.xpose.msra.mxu0 0.0
        %493 = vmatprep.subr.mxu0 0.0
        %494 = vmatpush1.xpose.msra.mxu0 0.0
        %495 = vmatprep.subr.mxu0 0.0
        %496 = vmatpush1.xpose.msra.mxu0 0.0
        %497 = vmatprep.subr.mxu0 0.0
        %498 = vmatpush1.xpose.msra.mxu0 0.0
        %499 = vmatprep.subr.mxu0 0.0
        %500 = vmatpush1.xpose.msra.mxu0 0.0
        %501 = vmatprep.subr.mxu0 0.0
        %502 = vmatpush1.xpose.msra.mxu0 0.0
        %503 = vmatprep.subr.mxu0 0.0
        %504 = vmatpush1.xpose.msra.mxu0 0.0
        %505 = vmatprep.subr.mxu0 0.0
        %506 = vmatpush1.xpose.msra.mxu0 0.0
        %507 = vmatprep.subr.mxu0 0.0
        %508 = vmatpush1.xpose.msra.mxu0 0.0
        %509 = vmatprep.subr.mxu0 0.0
        %510 = vmatpush1.xpose.msra.mxu0 0.0
        %511 = vmatprep.subr.mxu0 0.0
        %512 = vmatpush1.xpose.msra.mxu0 0.0
        %513 = vmatprep.subr.mxu0 0.0
        %514 = vmatpush1.xpose.msra.mxu0 0.0
        %515 = vmatprep.subr.mxu0 0.0
        %516 = vmatpush1.xpose.msra.mxu0 0.0
        %517 = vmatprep.subr.mxu0 0.0
        %518 = vmatpush1.xpose.msra.mxu0 0.0
        %519 = vmatprep.subr.mxu0 0.0
        %520 = vmatpush1.xpose.msra.mxu0 0.0
        %521 = vmatprep.subr.mxu0 0.0
        %522 = vmatpush1.xpose.msra.mxu0 0.0
        %523 = vmatprep.subr.mxu0 0.0
        %524 = vmatpush1.xpose.msra.mxu0 0.0
        %525 = vmatprep.subr.mxu0 0.0
        %526 = vmatpush1.xpose.msra.mxu0 0.0
        %527 = vmatprep.subr.mxu0 0.0
        %528 = vmatpush1.xpose.msra.mxu0 0.0
        %529 = vmatprep.subr.mxu0 0.0
        %530 = vmatpush1.xpose.msra.mxu0 0.0
        %531 = vmatprep.subr.mxu0 0.0
        %532 = vmatpush1.xpose.msra.mxu0 0.0
        %533 = vmatprep.subr.mxu0 0.0
        %534 = vmatpush1.xpose.msra.mxu0 0.0
        %535 = vmatprep.subr.mxu0 0.0
        %536 = vmatpush1.xpose.msra.mxu0 0.0
        %537 = vmatprep.subr.mxu0 0.0
        %538 = vmatpush1.xpose.msra.mxu0 0.0
        %539 = vmatprep.subr.mxu0 0.0
        %540 = vmatpush1.xpose.msra.mxu0 0.0
        %541 = vmatprep.subr.mxu0 0.0
        %542 = vmatpush1.xpose.msra.mxu0 0.0
        %543 = vmatprep.subr.mxu0 0.0
        %544 = vmatpush1.xpose.msra.mxu0 0.0
        %545 = vmatprep.mubr.f32.mxu0 0.0
        %546 = vmatmul.mubr.f32.gmra.mrb[0].mxu0 %v476
        %v547 = vpop.f32.mrb[0].mxu0
        %v548 = vadd.f32 0.0, %v547
        %v549 = vpop.f32.mrb[0].mxu0
        %550 = vdwg.mxu0
        %v551 = vld [vmem:[#allocation3] sm:$0xff]
        %vm552 = vcmask 64512
        %v553 = vsel %vm552, %v548, -inf
        %554 = vmax.xlane.f32.xlu0 %v553
        %v555 = vpop.xlane.xlu0 %554
        %v556 = vmax.f32 %v551, %v555
        %v557 = vsub.f32 %v551, %v556
        %v558 = vpow.pop %v557
        %560 = vset.pattern.permute.xlu0 0
        %561 = vperm.xlu0 %560, %v556
        %v562 = vpop.permute.xlu0 %561
        %v564 = vsub.f32 %v548, %v562
        %v565 = vpow.pop %v564
        %v566 = vld [vmem:[#allocation4] sm:$0xff]
        %v567 = vmul.f32 %v558, %v566
        %v568 = vsel %vm552, %v565, 0.0
        %569 = vadd.xlane.f32.xlu0 %v568
        %v570 = vpop.xlane.xlu0 %569
        %v571 = vadd.f32 %v567, %v570
        %vm572 = vcmask 7168
        %573 = vst.msk [vmem:[#allocation4] sm:$0xff] %vm572, %v571
        %v574 = vld [vmem:[#allocation5] sm:$0xff]
        %576 = vset.pattern.permute.xlu0 0
        %577 = vperm.xlu0 %576, %v558
        %v578 = vpop.permute.xlu0 %577
        %v580 = vmul.f32 %v578, %v574
        %v582 = vsel %vm552, %v565, 0
        %584 = vmatprep.subr.mxu0 0.0
        %585 = vmatpush1.msra.mxu0 %v395
        %586 = vmatprep.subr.mxu0 0.0
        %587 = vmatpush1.msra.mxu0 0.0
        %588 = vmatprep.subr.mxu0 0.0
        %589 = vmatpush1.msra.mxu0 0.0
        %590 = vmatprep.subr.mxu0 0.0
        %591 = vmatpush1.msra.mxu0 0.0
        %592 = vmatprep.subr.mxu0 0.0
        %593 = vmatpush1.msra.mxu0 0.0
        %594 = vmatprep.subr.mxu0 0.0
        %595 = vmatpush1.msra.mxu0 0.0
        %596 = vmatprep.subr.mxu0 0.0
        %597 = vmatpush1.msra.mxu0 0.0
        %598 = vmatprep.subr.mxu0 0.0
        %599 = vmatpush1.msra.mxu0 0.0
        %600 = vmatprep.subr.mxu0 0.0
        %601 = vmatpush1.msra.mxu0 0.0
        %602 = vmatprep.subr.mxu0 0.0
        %603 = vmatpush1.msra.mxu0 0.0
        %604 = vmatprep.subr.mxu0 0.0
        %605 = vmatpush1.msra.mxu0 0.0
        %606 = vmatprep.subr.mxu0 0.0
        %607 = vmatpush1.msra.mxu0 0.0
        %608 = vmatprep.subr.mxu0 0.0
        %609 = vmatpush1.msra.mxu0 0.0
        %610 = vmatprep.subr.mxu0 0.0
        %611 = vmatpush1.msra.mxu0 0.0
        %612 = vmatprep.subr.mxu0 0.0
        %613 = vmatpush1.msra.mxu0 0.0
        %614 = vmatprep.subr.mxu0 0.0
        %615 = vmatpush1.msra.mxu0 0.0
        %616 = vmatprep.subr.mxu0 0.0
        %617 = vmatpush1.msra.mxu0 0.0
        %618 = vmatprep.subr.mxu0 0.0
        %619 = vmatpush1.msra.mxu0 0.0
        %620 = vmatprep.subr.mxu0 0.0
        %621 = vmatpush1.msra.mxu0 0.0
        %622 = vmatprep.subr.mxu0 0.0
        %623 = vmatpush1.msra.mxu0 0.0
        %624 = vmatprep.subr.mxu0 0.0
        %625 = vmatpush1.msra.mxu0 0.0
        %626 = vmatprep.subr.mxu0 0.0
        %627 = vmatpush1.msra.mxu0 0.0
        %628 = vmatprep.subr.mxu0 0.0
        %629 = vmatpush1.msra.mxu0 0.0
        %630 = vmatprep.subr.mxu0 0.0
        %631 = vmatpush1.msra.mxu0 0.0
        %632 = vmatprep.subr.mxu0 0.0
        %633 = vmatpush1.msra.mxu0 0.0
        %634 = vmatprep.subr.mxu0 0.0
        %635 = vmatpush1.msra.mxu0 0.0
        %636 = vmatprep.subr.mxu0 0.0
        %637 = vmatpush1.msra.mxu0 0.0
        %638 = vmatprep.subr.mxu0 0.0
        %639 = vmatpush1.msra.mxu0 0.0
        %640 = vmatprep.subr.mxu0 0.0
        %641 = vmatpush1.msra.mxu0 0.0
        %642 = vmatprep.subr.mxu0 0.0
        %643 = vmatpush1.msra.mxu0 0.0
        %644 = vmatprep.subr.mxu0 0.0
        %645 = vmatpush1.msra.mxu0 0.0
        %646 = vmatprep.subr.mxu0 0.0
        %647 = vmatpush1.msra.mxu0 0.0
        %648 = vmatprep.mubr.f32.mxu0 0.0
        %649 = vmatmul.mubr.f32.gmra.mrb[0].mxu0 %v582
        %v650 = vpop.f32.mrb[0].mxu0
        %v651 = vadd.f32 0.0, %v650
        %v652 = vpop.f32.mrb[0].mxu0
        %653 = vdwg.mxu0
        %v654 = vadd.f32 %v580, %v651
        %655 = vst.msk [vmem:[#allocation5] sm:$0xff] %vm400, %v654
        %656 = vst.msk [vmem:[#allocation3] sm:$0xff] %vm572, %v556
        // Predicated region
        $region57: #{tpu_custom_call.1} parent=35 // pred_check
          %p657 = pneg %p306
        $region58: #{tpu_custom_call.1} parent=35 // pred_check_branch
          %659 = sbr.rel (%p657) target = $region60
        $region59: #{tpu_custom_call.1} parent=35 // pred_region
          %v660 = vld [vmem:[#allocation4] sm:$0xff]
          %v661 = vrcp.pop %v660
          %v662 = vmul.f32 1.0, %v661
          %v663 = vld [vmem:[#allocation5] sm:$0xff]
          %665 = vset.pattern.permute.xlu0 0
          %666 = vperm.xlu0 %665, %v662
          %v667 = vpop.permute.xlu0 %666
          %v669 = vmul.f32 %v663, %v667
          %670 = vst.msk [vmem:[%s305] sm:$0xff] %vm400, %v669
        $region60: #{tpu_custom_call.1} parent=35 // pred_fallthru
          _
        %s671 = sand.u32 %s152, 1
        %s672 = scalar_lea.sflag [#allocation8], %s671
        %s673 = sand.u32 %s152, 1
        %s674 = smul.addr %s673, 8
        %s675 = scalar_lea.vmem [#allocation14], %s674
        // Predicated region
        $region61: #{tpu_custom_call.1} parent=35 // pred_check
          %p676 = pneg %p162
        $region62: #{tpu_custom_call.1} parent=35 // pred_check_branch
          %678 = sbr.rel (%p676) target = $region64
        $region63: #{tpu_custom_call.1} parent=35 // pred_region
          %s680 = ssub.s32 128, 128
          %681 = vsyncadd %s672, %s680
          %s682 = sadd.s32 %s31, %s30
          %s683 = smul.addr %s682, 128
          %s684 = scalar_lea.hbm %s4, %s683
          %s686 = sshll.u32 %s675, 4
          %s687 = int_to_ptr.vmem [resolvable:$true] %s686
          %689 = dma.vmem_to_hbm [thread:$0]  %s687, 128, %s684, %s672
        $region64: #{tpu_custom_call.1} parent=35 // pred_fallthru
          _
      $region36: #{tpu_custom_call.1} parent=5 // pred_fallthru
        _
      %p690 = scmp.le.s32.totalorder 2, %s20
      // Predicated region
      $region65: #{tpu_custom_call.1} parent=5 // pred_check
        %p691 = pneg %p690
      $region66: #{tpu_custom_call.1} parent=5 // pred_check_branch
        %693 = sbr.rel (%p691) target = $region68
      $region67: #{tpu_custom_call.1} parent=5 // pred_region
        %s694 = ssub.s32 %s20, 2
        // Predicated region
        $region69: #{tpu_custom_call.1} parent=67 // pred_check
          %p695 = pneg %p168
        $region70: #{tpu_custom_call.1} parent=67 // pred_check_branch
          %697 = sbr.rel (%p695) target = $region72
        $region71: #{tpu_custom_call.1} parent=67 // pred_region
          %s698 = sand.u32 %s153, 1
          %s699 = scalar_lea.sflag [#allocation8], %s698
          %s700 = sand.u32 %s153, 1
          %s701 = smul.addr %s700, 8
          %s702 = scalar_lea.vmem [#allocation14], %s701
          %703 = dma.done %s699, 128
        $region72: #{tpu_custom_call.1} parent=67 // pred_fallthru
          _
      $region68: #{tpu_custom_call.1} parent=5 // pred_fallthru
        _
    $region6: #{tpu_custom_call.1} parent=1 // loop_footer
      %s24 = sadd.s32 1, %s20
    $region7: #{tpu_custom_call.1} parent=1 // loop_footer_branch
      %19 = sbr.rel target = $region3
    $region8: #{tpu_custom_call.1} parent=1 // loop_exit
      _
    %704 = vsyncpa [#allocation7], 1
    %s705 = scalar_lea.sflag [#allocation7], 1
    %706 = vsyncpa %s705, 1
    %707 = vsyncpa [#allocation10], 1
    %s708 = scalar_lea.sflag [#allocation10], 1
    %709 = vsyncpa %s708, 1
    %710 = vsyncpa [#allocation13], 1
    %711 = vsyncpa [#allocation8], 1
    %s712 = scalar_lea.sflag [#allocation8], 1
    %713 = vsyncpa %s712, 1

// kernel: tpu_custom_call.1
$region0: #{tpu_custom_call.1}
  #allocation0 [shape = 'u32[]', space=smem, size = 0x4, offset = 0x4, fixed_abs, tag = 'smem constant byte address 0x4 - core index']
  #allocation1 [shape = 'u32[144,128]{1,0:T(1,128)}', space=vmem, size = 0x12000, scoped, tag = 'internal scratch']
  #allocation2 [shape = 'f32[8,32]{1,0:T(8,128)}', space=vmem, size = 0x1000, scoped, tag = 'scratch operand']
  #allocation3 [shape = 'f32[8,1]{1,0:T(8,128)}', space=vmem, size = 0x1000, scoped, tag = 'scratch operand']
  #allocation4 [shape = 'f32[8,1]{1,0:T(8,128)}', space=vmem, size = 0x1000, scoped, tag = 'scratch operand']
  #allocation5 [shape = 'f32[8,32]{1,0:T(8,128)}', space=vmem, size = 0x1000, scoped, tag = 'scratch operand']
  %s0 = inlined_call_operand.hbm [shape: f32[2,8,32], index: 0, kind: input, shape index: {}]
  %s1 = inlined_call_operand.hbm [shape: f32[2,8,32], index: 1, kind: input, shape index: {}]
  %s2 = inlined_call_operand.hbm [shape: f32[32,32], index: 2, kind: input, shape index: {}]
  %s3 = inlined_call_operand.hbm [shape: f32[32,32], index: 3, kind: input, shape index: {}]
  %s4 = inlined_call_operand.hbm [shape: f32[2,8,32], index: 4, kind: output, shape index: {}]
  %s5 = sld [smem:[#allocation0]]
  $region73: #{tpu_custom_call.1} parent=0
    _
  %s7 = ssub.s32 1, %s5
  %s8 = scalar_select 0, %s7, %s5
  $region1: #{tpu_custom_call.1} parent=0
    #allocation6 [shape = 'u8[8192]{0}', space=vmem, size = 0x2000, scoped, tag = 'input window, operand 0']
    #allocation7 [shape = 's32[2]{0}', space=sflag, size = 0x8, scoped, tag = 'scoped memory for tpu_custom_call.1']
    #allocation8 [shape = 's32[2]{0}', space=sflag, size = 0x8, scoped, tag = 'scoped memory for tpu_custom_call.1']
    #allocation9 [shape = 'u8[8192]{0}', space=vmem, size = 0x2000, scoped, tag = 'input window, operand 1']
    #allocation10 [shape = 's32[2]{0}', space=sflag, size = 0x8, scoped, tag = 'scoped memory for tpu_custom_call.1']
    #allocation11 [shape = 'u8[16384]{0}', space=vmem, size = 0x4000, scoped, tag = 'input window, operand 2, single buffered']
    #allocation12 [shape = 'u8[16384]{0}', space=vmem, size = 0x4000, scoped, tag = 'input window, operand 3, single buffered']
    #allocation13 [shape = 's32[1]{0}', space=sflag, size = 0x4, scoped, tag = 'scoped memory for tpu_custom_call.1']
    #allocation14 [shape = 'u8[8192]{0}', space=vmem, size = 0x2000, scoped, tag = 'output window, operand 0']
    %9 = vsyncpa [#allocation7], 0
    %s10 = scalar_lea.sflag [#allocation7], 1
    %11 = vsyncpa %s10, 0
    %12 = vsyncpa [#allocation10], 0
    %s13 = scalar_lea.sflag [#allocation10], 1
    %14 = vsyncpa %s13, 0
    %15 = vsyncpa [#allocation13], 0
    %16 = vsyncpa [#allocation8], 0
    %s17 = scalar_lea.sflag [#allocation8], 1
    %18 = vsyncpa %s17, 0
    loop: start=0, step=1, limit=4
    $region2: #{tpu_custom_call.1} parent=1 // loop_pre_header
      _
    $region3: #{tpu_custom_call.1} parent=1 // loop_header
      %s20 = sphi 0, %s24
      %p21 = scmp.ge.s32.totalorder %s20, 4
      %s27 = sphi 0, %s46
      %s28 = sphi 0, %s42
      %s29 = sphi 0, %s38
      %s30 = sphi 0, %s27
      %s31 = sphi 0, %s28
      %s32 = sphi 0, %s29
      %s33 = sphi 0, %s30
      %s34 = sphi 0, %s31
      %s35 = sphi 0, %s32
      %s51 = sphi 0, %s53
      %s54 = sphi 0, %s51
      %s55 = sphi 0, %s54
      %s71 = sphi 0, %s55
      %s79 = sphi 0, %s81
      %s82 = sphi 0, %s79
      %s83 = sphi 0, %s82
      %s99 = sphi 0, %s83
      %s103 = sphi 0, %s103
      %s105 = sphi 0, %s103
      %s106 = sphi 0, %s105
      %s120 = sphi 0, %s106
      %s124 = sphi 0, %s124
      %s126 = sphi 0, %s124
      %s127 = sphi 0, %s126
      %s141 = sphi 0, %s127
      %s149 = sphi 0, %s151
      %s152 = sphi 0, %s149
      %s153 = sphi 0, %s152
      %s169 = sphi 0, %s153
    $region4: #{tpu_custom_call.1} parent=1 // loop_header_branch
      %23 = sbr.rel (%p21) target = $region8
    $region5: #{tpu_custom_call.1} parent=1 // loop_body
      %s25 = ssub.s32 %s20, 1
      %s26 = ssub.s32 %s20, 2
      %s36 = sadd.s32 1, %s29
      %p37 = scmp.ge.s32.totalorder %s36, 1
      %s38 = scalar_select %p37, 0, %s36
      %s39 = sadd.s32 1, %s28
      %s40 = scalar_select %p37, %s39, %s28
      %p41 = scmp.ge.s32.totalorder %s40, 1
      %s42 = scalar_select %p41, 0, %s40
      %s43 = sadd.s32 1, %s27
      %s44 = scalar_select %p41, %s43, %s27
      %p45 = scmp.ge.s32.totalorder %s44, 2
      %s46 = scalar_select %p45, 0, %s44
      %s47 = ssub.s32 %s27, %s46
      %s48 = ssub.s32 %s28, %s42
      %s49 = sor.u32 %s47, %s48
      %p50 = scmp.eq.s32.totalorder %s49, 0
      %s52 = sadd.s32 %s51, 1
      %s53 = scalar_select %p50, %s51, %s52
      %p56 = pneg %p50
      %p57 = scmp.eq.s32.totalorder %s20, 1
      %p58 = por %p56, %p57
      %p59 = scmp.ne.s32.totalorder %s51, %s54
      %p60 = scmp.eq.s32.totalorder %s20, 0
      %p61 = por %p59, %p60
      %p62 = scmp.ne.s32.totalorder %s51, %s54
      %p63 = scmp.eq.s32.totalorder %s25, 1
      %p64 = por %p62, %p63
      %p65 = scmp.ne.s32.totalorder %s54, %s55
      %p66 = scmp.eq.s32.totalorder %s25, 0
      %p67 = por %p65, %p66
      %p68 = scmp.ne.s32.totalorder %s54, %s55
      %p69 = scmp.eq.s32.totalorder %s26, 1
      %p70 = por %p68, %p69
      %p72 = scmp.ne.s32.totalorder %s55, %s71
      %p73 = scmp.eq.s32.totalorder %s26, 0
      %p74 = por %p72, %p73
      %s75 = ssub.s32 %s27, %s46
      %s76 = ssub.s32 %s29, %s38
      %s77 = sor.u32 %s75, %s76
      %p78 = scmp.eq.s32.totalorder %s77, 0
      %s80 = sadd.s32 %s79, 1
      %s81 = scalar_select %p78, %s79, %s80
      %p84 = pneg %p78
      %p85 = scmp.eq.s32.totalorder %s20, 1
      %p86 = por %p84, %p85
      %p87 = scmp.ne.s32.totalorder %s79, %s82
      %p88 = scmp.eq.s32.totalorder %s20, 0
      %p89 = por %p87, %p88
      %p90 = scmp.ne.s32.totalorder %s79, %s82
      %p91 = scmp.eq.s32.totalorder %s25, 1
      %p92 = por %p90, %p91
      %p93 = scmp.ne.s32.totalorder %s82, %s83
      %p94 = scmp.eq.s32.totalorder %s25, 0
      %p95 = por %p93, %p94
      %p96 = scmp.ne.s32.totalorder %s82, %s83
      %p97 = scmp.eq.s32.totalorder %s26, 1
      %p98 = por %p96, %p97
      %p100 = scmp.ne.s32.totalorder %s83, %s99
      %p101 = scmp.eq.s32.totalorder %s26, 0
      %p102 = por %p100, %p101
      %s104 = sadd.s32 %s103, 1
      %p107 = scmp.eq.s32.totalorder %s20, 1
      %p108 = scmp.ne.s32.totalorder %s103, %s105
      %p109 = scmp.eq.s32.totalorder %s20, 0
      %p110 = por %p108, %p109
      %p111 = scmp.ne.s32.totalorder %s103, %s105
      %p112 = scmp.eq.s32.totalorder %s25, 1
      %p113 = por %p111, %p112
      %p114 = scmp.ne.s32.totalorder %s105, %s106
      %p115 = scmp.eq.s32.totalorder %s25, 0
      %p116 = por %p114, %p115
      %p117 = scmp.ne.s32.totalorder %s105, %s106
      %p118 = scmp.eq.s32.totalorder %s26, 1
      %p119 = por %p117, %p118
      %p121 = scmp.ne.s32.totalorder %s106, %s120
      %p122 = scmp.eq.s32.totalorder %s26, 0
      %p123 = por %p121, %p122
      %s125 = sadd.s32 %s124, 1
      %p128 = scmp.eq.s32.totalorder %s20, 1
      %p129 = scmp.ne.s32.totalorder %s124, %s126
      %p130 = scmp.eq.s32.totalorder %s20, 0
      %p131 = por %p129, %p130
      %p132 = scmp.ne.s32.totalorder %s124, %s126
      %p133 = scmp.eq.s32.totalorder %s25, 1
      %p134 = por %p132, %p133
      %p135 = scmp.ne.s32.totalorder %s126, %s127
      %p136 = scmp.eq.s32.totalorder %s25, 0
      %p137 = por %p135, %p136
      %p138 = scmp.ne.s32.totalorder %s126, %s127
      %p139 = scmp.eq.s32.totalorder %s26, 1
      %p140 = por %p138, %p139
      %p142 = scmp.ne.s32.totalorder %s127, %s141
      %p143 = scmp.eq.s32.totalorder %s26, 0
      %p144 = por %p142, %p143
      %s145 = ssub.s32 %s27, %s46
      %s146 = ssub.s32 %s28, %s42
      %s147 = sor.u32 %s145, %s146
      %p148 = scmp.eq.s32.totalorder %s147, 0
      %s150 = sadd.s32 %s149, 1
      %s151 = scalar_select %p148, %s149, %s150
      %p154 = pneg %p148
      %p155 = scmp.eq.s32.totalorder %s20, 1
      %p156 = por %p154, %p155
      %p157 = scmp.ne.s32.totalorder %s149, %s152
      %p158 = scmp.eq.s32.totalorder %s20, 0
      %p159 = por %p157, %p158
      %p160 = scmp.ne.s32.totalorder %s149, %s152
      %p161 = scmp.eq.s32.totalorder %s25, 1
      %p162 = por %p160, %p161
      %p163 = scmp.ne.s32.totalorder %s152, %s153
      %p164 = scmp.eq.s32.totalorder %s25, 0
      %p165 = por %p163, %p164
      %p166 = scmp.ne.s32.totalorder %s152, %s153
      %p167 = scmp.eq.s32.totalorder %s26, 1
      %p168 = por %p166, %p167
      %p170 = scmp.ne.s32.totalorder %s153, %s169
      %p171 = scmp.eq.s32.totalorder %s26, 0
      %p172 = por %p170, %p171
      %p173 = scmp.le.s32.totalorder 1, %s20
      %p174 = scmp.lt.s32.totalorder %s20, 3
      %p175 = pnand %p173, %p174
      %p176 = pneg %p175
      // Predicated region
      $region9: #{tpu_custom_call.1} parent=5 // pred_check
        _
      $region10: #{tpu_custom_call.1} parent=5 // pred_check_branch
        %178 = sbr.rel (%p175) target = $region12
      $region11: #{tpu_custom_call.1} parent=5 // pred_region
        %s179 = ssub.s32 %s20, 1
        // Predicated region
        $region13: #{tpu_custom_call.1} parent=11 // pred_check
          %p180 = pneg %p116
        $region14: #{tpu_custom_call.1} parent=11 // pred_check_branch
          %182 = sbr.rel (%p180) target = $region16
        $region15: #{tpu_custom_call.1} parent=11 // pred_region
          %s184 = ssub.s32 512, 512
          %185 = vsyncadd [#allocation10], %s184
          %s186 = sshll.u32 [#allocation11], 4
          %s187 = int_to_ptr.vmem [resolvable:$true] %s186
          %192 = dma.hbm_to_vmem [thread:$0]  %s2, 512, %s187, [#allocation10], 128, 128, 8
        $region16: #{tpu_custom_call.1} parent=11 // pred_fallthru
          _
        // Predicated region
        $region17: #{tpu_custom_call.1} parent=11 // pred_check
          %p193 = pneg %p137
        $region18: #{tpu_custom_call.1} parent=11 // pred_check_branch
          %195 = sbr.rel (%p193) target = $region20
        $region19: #{tpu_custom_call.1} parent=11 // pred_region
          %s197 = ssub.s32 512, 512
          %198 = vsyncadd [#allocation13], %s197
          %s199 = sshll.u32 [#allocation12], 4
          %s200 = int_to_ptr.vmem [resolvable:$true] %s199
          %205 = dma.hbm_to_vmem [thread:$0]  %s3, 512, %s200, [#allocation13], 128, 128, 8
        $region20: #{tpu_custom_call.1} parent=11 // pred_fallthru
          _
      $region12: #{tpu_custom_call.1} parent=5 // pred_fallthru
        _
      %p206 = scmp.lt.s32.totalorder %s20, 2
      // Predicated region
      $region21: #{tpu_custom_call.1} parent=5 // pred_check
        %p207 = pneg %p206
      $region22: #{tpu_custom_call.1} parent=5 // pred_check_branch
        %209 = sbr.rel (%p207) target = $region24
      $region23: #{tpu_custom_call.1} parent=5 // pred_region
        // Predicated region
        $region25: #{tpu_custom_call.1} parent=23 // pred_check
          %p210 = pneg %p61
        $region26: #{tpu_custom_call.1} parent=23 // pred_check_branch
          %212 = sbr.rel (%p210) target = $region28
        $region27: #{tpu_custom_call.1} parent=23 // pred_region
          %s213 = sand.u32 %s51, 1
          %s214 = scalar_lea.sflag [#allocation7], %s213
          %s215 = sand.u32 %s51, 1
          %s216 = smul.addr %s215, 8
          %s217 = scalar_lea.vmem [#allocation6], %s216
          %s219 = ssub.s32 128, 128
          %220 = vsyncadd %s214, %s219
          %s221 = sadd.s32 %s28, %s27
          %s222 = smul.addr %s221, 128
          %s223 = scalar_lea.hbm %s0, %s222
          %s225 = sshll.u32 %s217, 4
          %s226 = int_to_ptr.vmem [resolvable:$true] %s225
          %228 = dma.hbm_to_vmem [thread:$0]  %s223, 128, %s226, %s214
        $region28: #{tpu_custom_call.1} parent=23 // pred_fallthru
          _
        // Predicated region
        $region29: #{tpu_custom_call.1} parent=23 // pred_check
          %p229 = pneg %p89
        $region30: #{tpu_custom_call.1} parent=23 // pred_check_branch
          %231 = sbr.rel (%p229) target = $region32
        $region31: #{tpu_custom_call.1} parent=23 // pred_region
          %s232 = sand.u32 %s20, 1
          %s233 = scalar_lea.sflag [#allocation10], %s232
          %s234 = sand.u32 %s79, 1
          %s235 = smul.addr %s234, 8
          %s236 = scalar_lea.vmem [#allocation9], %s235
          %s238 = ssub.s32 128, 128
          %239 = vsyncadd %s233, %s238
          %s240 = sadd.s32 %s29, %s27
          %s241 = smul.addr %s240, 128
          %s242 = scalar_lea.hbm %s1, %s241
          %s244 = sshll.u32 %s236, 4
          %s245 = int_to_ptr.vmem [resolvable:$true] %s244
          %247 = dma.hbm_to_vmem [thread:$0]  %s242, 128, %s245, %s233
        $region32: #{tpu_custom_call.1} parent=23 // pred_fallthru
          _
      $region24: #{tpu_custom_call.1} parent=5 // pred_fallthru
        _
      %p248 = scmp.le.s32.totalorder 1, %s20
      %p249 = scmp.lt.s32.totalorder %s20, 3
      %p250 = pnand %p248, %p249
      %p251 = pneg %p250
      // Predicated region
      $region33: #{tpu_custom_call.1} parent=5 // pred_check
        _
      $region34: #{tpu_custom_call.1} parent=5 // pred_check_branch
        %253 = sbr.rel (%p250) target = $region36
      $region35: #{tpu_custom_call.1} parent=5 // pred_region
        %s254 = ssub.s32 %s20, 1
        %s255 = sand.u32 %s54, 1
        %s256 = scalar_lea.sflag [#allocation7], %s255
        %s257 = sand.u32 %s54, 1
        %s258 = smul.addr %s257, 8
        %s259 = scalar_lea.vmem [#allocation6], %s258
        // Predicated region
        $region37: #{tpu_custom_call.1} parent=35 // pred_check
          %p260 = pneg %p67
        $region38: #{tpu_custom_call.1} parent=35 // pred_check_branch
          %262 = sbr.rel (%p260) target = $region40
        $region39: #{tpu_custom_call.1} parent=35 // pred_region
          %263 = dma.done %s256, 128
        $region40: #{tpu_custom_call.1} parent=35 // pred_fallthru
          _
        %s264 = sand.u32 %s25, 1
        %s265 = scalar_lea.sflag [#allocation10], %s264
        %s266 = sand.u32 %s82, 1
        %s267 = smul.addr %s266, 8
        %s268 = scalar_lea.vmem [#allocation9], %s267
        // Predicated region
        $region41: #{tpu_custom_call.1} parent=35 // pred_check
          %p269 = pneg %p95
        $region42: #{tpu_custom_call.1} parent=35 // pred_check_branch
          %271 = sbr.rel (%p269) target = $region44
        $region43: #{tpu_custom_call.1} parent=35 // pred_region
          %272 = dma.done %s265, 128
        $region44: #{tpu_custom_call.1} parent=35 // pred_fallthru
          _
        // Predicated region
        $region45: #{tpu_custom_call.1} parent=35 // pred_check
          %p273 = pneg %p116
        $region46: #{tpu_custom_call.1} parent=35 // pred_check_branch
          %275 = sbr.rel (%p273) target = $region48
        $region47: #{tpu_custom_call.1} parent=35 // pred_region
          %276 = dma.done [#allocation10], 512
        $region48: #{tpu_custom_call.1} parent=35 // pred_fallthru
          _
        // Predicated region
        $region49: #{tpu_custom_call.1} parent=35 // pred_check
          %p277 = pneg %p137
        $region50: #{tpu_custom_call.1} parent=35 // pred_check_branch
          %279 = sbr.rel (%p277) target = $region52
        $region51: #{tpu_custom_call.1} parent=35 // pred_region
          %280 = dma.done [#allocation13], 512
        $region52: #{tpu_custom_call.1} parent=35 // pred_fallthru
          _
        %s281 = sand.u32 %s54, 1
        %s282 = scalar_lea.sflag [#allocation7], %s281
        %s283 = sand.u32 %s54, 1
        %s284 = smul.addr %s283, 8
        %s285 = scalar_lea.vmem [#allocation6], %s284
        %p286 = pneg %p67
        %p287 = pneg %p64
        %s288 = sand.u32 %s25, 1
        %s289 = scalar_lea.sflag [#allocation10], %s288
        %s290 = sand.u32 %s82, 1
        %s291 = smul.addr %s290, 8
        %s292 = scalar_lea.vmem [#allocation9], %s291
        %p293 = pneg %p95
        %p294 = pneg %p92
        %p295 = pneg %p116
        %p296 = pneg %p113
        %p297 = pneg %p137
        %p298 = pneg %p134
        %p299 = pneg %p165
        %p300 = pneg %p162
        %s301 = sand.u32 %s152, 1
        %s302 = scalar_lea.sflag [#allocation8], %s301
        %s303 = sand.u32 %s152, 1
        %s304 = smul.addr %s303, 8
        %s305 = scalar_lea.vmem [#allocation14], %s304
        %p306 = scmp.eq.s32.totalorder %s32, 0
        // Predicated region
        $region53: #{tpu_custom_call.1} parent=35 // pred_check
          %p307 = pneg %p306
        $region54: #{tpu_custom_call.1} parent=35 // pred_check_branch
          %309 = sbr.rel (%p307) target = $region56
        $region55: #{tpu_custom_call.1} parent=35 // pred_region
          %v310 = vld [vmem:[%s259] sm:$0xff]
          %v311 = vld [vmem:[#allocation11] sm:$0xff]
          %v312 = vld [vmem:[#allocation11 + $0x8] sm:$0xff]
          %v313 = vld [vmem:[#allocation11 + $0x10] sm:$0xff]
          %v314 = vld [vmem:[#allocation11 + $0x18] sm:$0xff]
          %vm315 = vcmask 261120
          %v317 = vsel %vm315, %v310, 0
          %319 = vmatprep.subr.mxu0 0.0
          %320 = vmatpush1.msra.mxu0 %v311
          %321 = vmatprep.subr.mxu0 0.0
          %322 = vmatpush1.msra.mxu0 %v312
          %323 = vmatprep.subr.mxu0 0.0
          %324 = vmatpush1.msra.mxu0 %v313
          %325 = vmatprep.subr.mxu0 0.0
          %326 = vmatpush1.msra.mxu0 %v314
          %327 = vmatprep.subr.mxu0 0.0
          %328 = vmatpush1.msra.mxu0 0.0
          %329 = vmatprep.subr.mxu0 0.0
          %330 = vmatpush1.msra.mxu0 0.0
          %331 = vmatprep.subr.mxu0 0.0
          %332 = vmatpush1.msra.mxu0 0.0
          %333 = vmatprep.subr.mxu0 0.0
          %334 = vmatpush1.msra.mxu0 0.0
          %335 = vmatprep.subr.mxu0 0.0
          %336 = vmatpush1.msra.mxu0 0.0
          %337 = vmatprep.subr.mxu0 0.0
          %338 = vmatpush1.msra.mxu0 0.0
          %339 = vmatprep.subr.mxu0 0.0
          %340 = vmatpush1.msra.mxu0 0.0
          %341 = vmatprep.subr.mxu0 0.0
          %342 = vmatpush1.msra.mxu0 0.0
          %343 = vmatprep.subr.mxu0 0.0
          %344 = vmatpush1.msra.mxu0 0.0
          %345 = vmatprep.subr.mxu0 0.0
          %346 = vmatpush1.msra.mxu0 0.0
          %347 = vmatprep.subr.mxu0 0.0
          %348 = vmatpush1.msra.mxu0 0.0
          %349 = vmatprep.subr.mxu0 0.0
          %350 = vmatpush1.msra.mxu0 0.0
          %351 = vmatprep.subr.mxu0 0.0
          %352 = vmatpush1.msra.mxu0 0.0
          %353 = vmatprep.subr.mxu0 0.0
          %354 = vmatpush1.msra.mxu0 0.0
          %355 = vmatprep.subr.mxu0 0.0
          %356 = vmatpush1.msra.mxu0 0.0
          %357 = vmatprep.subr.mxu0 0.0
          %358 = vmatpush1.msra.mxu0 0.0
          %359 = vmatprep.subr.mxu0 0.0
          %360 = vmatpush1.msra.mxu0 0.0
          %361 = vmatprep.subr.mxu0 0.0
          %362 = vmatpush1.msra.mxu0 0.0
          %363 = vmatprep.subr.mxu0 0.0
          %364 = vmatpush1.msra.mxu0 0.0
          %365 = vmatprep.subr.mxu0 0.0
          %366 = vmatpush1.msra.mxu0 0.0
          %367 = vmatprep.subr.mxu0 0.0
          %368 = vmatpush1.msra.mxu0 0.0
          %369 = vmatprep.subr.mxu0 0.0
          %370 = vmatpush1.msra.mxu0 0.0
          %371 = vmatprep.subr.mxu0 0.0
          %372 = vmatpush1.msra.mxu0 0.0
          %373 = vmatprep.subr.mxu0 0.0
          %374 = vmatpush1.msra.mxu0 0.0
          %375 = vmatprep.subr.mxu0 0.0
          %376 = vmatpush1.msra.mxu0 0.0
          %377 = vmatprep.subr.mxu0 0.0
          %378 = vmatpush1.msra.mxu0 0.0
          %379 = vmatprep.subr.mxu0 0.0
          %380 = vmatpush1.msra.mxu0 0.0
          %381 = vmatprep.subr.mxu0 0.0
          %382 = vmatpush1.msra.mxu0 0.0
          %383 = vmatprep.mubr.f32.mxu0 0.0
          %384 = vmatmul.mubr.f32.gmra.mrb[0].mxu0 %v317
          %v385 = vpop.f32.mrb[0].mxu0
          %v386 = vadd.f32 0.0, %v385
          %v387 = vpop.f32.mrb[0].mxu0
          %388 = vdwg.mxu0
          %v389 = vmul.f32 %v386, 0.25503486
          %390 = vst.msk [vmem:[#allocation2] sm:$0xff] %vm315, %v389
          %vm391 = vcmask 7168
          %392 = vst.msk [vmem:[#allocation3] sm:$0xff] %vm391, -inf
          %393 = vst.msk [vmem:[#allocation4] sm:$0xff] %vm391, 0.0
          %394 = vst.msk [vmem:[#allocation5] sm:$0xff] %vm315, 0.0
        $region56: #{tpu_custom_call.1} parent=35 // pred_fallthru
          _
        %v395 = vld [vmem:[%s268] sm:$0xff]
        %v396 = vld [vmem:[#allocation12] sm:$0xff]
        %v397 = vld [vmem:[#allocation12 + $0x8] sm:$0xff]
        %v398 = vld [vmem:[#allocation12 + $0x10] sm:$0xff]
        %v399 = vld [vmem:[#allocation12 + $0x18] sm:$0xff]
        %vm400 = vcmask 261120
        %v402 = vsel %vm400, %v395, 0
        %404 = vmatprep.subr.mxu0 0.0
        %405 = vmatpush1.msra.mxu0 %v396
        %406 = vmatprep.subr.mxu0 0.0
        %407 = vmatpush1.msra.mxu0 %v397
        %408 = vmatprep.subr.mxu0 0.0
        %409 = vmatpush1.msra.mxu0 %v398
        %410 = vmatprep.subr.mxu0 0.0
        %411 = vmatpush1.msra.mxu0 %v399
        %412 = vmatprep.subr.mxu0 0.0
        %413 = vmatpush1.msra.mxu0 0.0
        %414 = vmatprep.subr.mxu0 0.0
        %415 = vmatpush1.msra.mxu0 0.0
        %416 = vmatprep.subr.mxu0 0.0
        %417 = vmatpush1.msra.mxu0 0.0
        %418 = vmatprep.subr.mxu0 0.0
        %419 = vmatpush1.msra.mxu0 0.0
        %420 = vmatprep.subr.mxu0 0.0
        %421 = vmatpush1.msra.mxu0 0.0
        %422 = vmatprep.subr.mxu0 0.0
        %423 = vmatpush1.msra.mxu0 0.0
        %424 = vmatprep.subr.mxu0 0.0
        %425 = vmatpush1.msra.mxu0 0.0
        %426 = vmatprep.subr.mxu0 0.0
        %427 = vmatpush1.msra.mxu0 0.0
        %428 = vmatprep.subr.mxu0 0.0
        %429 = vmatpush1.msra.mxu0 0.0
        %430 = vmatprep.subr.mxu0 0.0
        %431 = vmatpush1.msra.mxu0 0.0
        %432 = vmatprep.subr.mxu0 0.0
        %433 = vmatpush1.msra.mxu0 0.0
        %434 = vmatprep.subr.mxu0 0.0
        %435 = vmatpush1.msra.mxu0 0.0
        %436 = vmatprep.subr.mxu0 0.0
        %437 = vmatpush1.msra.mxu0 0.0
        %438 = vmatprep.subr.mxu0 0.0
        %439 = vmatpush1.msra.mxu0 0.0
        %440 = vmatprep.subr.mxu0 0.0
        %441 = vmatpush1.msra.mxu0 0.0
        %442 = vmatprep.subr.mxu0 0.0
        %443 = vmatpush1.msra.mxu0 0.0
        %444 = vmatprep.subr.mxu0 0.0
        %445 = vmatpush1.msra.mxu0 0.0
        %446 = vmatprep.subr.mxu0 0.0
        %447 = vmatpush1.msra.mxu0 0.0
        %448 = vmatprep.subr.mxu0 0.0
        %449 = vmatpush1.msra.mxu0 0.0
        %450 = vmatprep.subr.mxu0 0.0
        %451 = vmatpush1.msra.mxu0 0.0
        %452 = vmatprep.subr.mxu0 0.0
        %453 = vmatpush1.msra.mxu0 0.0
        %454 = vmatprep.subr.mxu0 0.0
        %455 = vmatpush1.msra.mxu0 0.0
        %456 = vmatprep.subr.mxu0 0.0
        %457 = vmatpush1.msra.mxu0 0.0
        %458 = vmatprep.subr.mxu0 0.0
        %459 = vmatpush1.msra.mxu0 0.0
        %460 = vmatprep.subr.mxu0 0.0
        %461 = vmatpush1.msra.mxu0 0.0
        %462 = vmatprep.subr.mxu0 0.0
        %463 = vmatpush1.msra.mxu0 0.0
        %464 = vmatprep.subr.mxu0 0.0
        %465 = vmatpush1.msra.mxu0 0.0
        %466 = vmatprep.subr.mxu0 0.0
        %467 = vmatpush1.msra.mxu0 0.0
        %468 = vmatprep.mubr.f32.mxu0 0.0
        %469 = vmatmul.mubr.f32.gmra.mrb[0].mxu0 %v402
        %v470 = vpop.f32.mrb[0].mxu0
        %v471 = vadd.f32 0.0, %v470
        %v472 = vpop.f32.mrb[0].mxu0
        %473 = vdwg.mxu0
        %v474 = vld [vmem:[#allocation2] sm:$0xff]
        %v476 = vsel %vm400, %v474, 0
        %v479 = vsel %vm400, %v471, 0
        %481 = vmatprep.subr.mxu0 0.0
        %482 = vmatpush1.xpose.msra.mxu0 %v479
        %483 = vmatprep.subr.mxu0 0.0
        %484 = vmatpush1.xpose.msra.mxu0 0.0
        %485 = vmatprep.subr.mxu0 0.0
        %486 = vmatpush1.xpose.msra.mxu0 0.0
        %487 = vmatprep.subr.mxu0 0.0
        %488 = vmatpush1.xpose.msra.mxu0 0.0
        %489 = vmatprep.subr.mxu0 0.0
        %490 = vmatpush1.xpose.msra.mxu0 0.0
        %491 = vmatprep.subr.mxu0 0.0
        %492 = vmatpush1.xpose.msra.mxu0 0.0
        %493 = vmatprep.subr.mxu0 0.0
        %494 = vmatpush1.xpose.msra.mxu0 0.0
        %495 = vmatprep.subr.mxu0 0.0
        %496 = vmatpush1.xpose.msra.mxu0 0.0
        %497 = vmatprep.subr.mxu0 0.0
        %498 = vmatpush1.xpose.msra.mxu0 0.0
        %499 = vmatprep.subr.mxu0 0.0
        %500 = vmatpush1.xpose.msra.mxu0 0.0
        %501 = vmatprep.subr.mxu0 0.0
        %502 = vmatpush1.xpose.msra.mxu0 0.0
        %503 = vmatprep.subr.mxu0 0.0
        %504 = vmatpush1.xpose.msra.mxu0 0.0
        %505 = vmatprep.subr.mxu0 0.0
        %506 = vmatpush1.xpose.msra.mxu0 0.0
        %507 = vmatprep.subr.mxu0 0.0
        %508 = vmatpush1.xpose.msra.mxu0 0.0
        %509 = vmatprep.subr.mxu0 0.0
        %510 = vmatpush1.xpose.msra.mxu0 0.0
        %511 = vmatprep.subr.mxu0 0.0
        %512 = vmatpush1.xpose.msra.mxu0 0.0
        %513 = vmatprep.subr.mxu0 0.0
        %514 = vmatpush1.xpose.msra.mxu0 0.0
        %515 = vmatprep.subr.mxu0 0.0
        %516 = vmatpush1.xpose.msra.mxu0 0.0
        %517 = vmatprep.subr.mxu0 0.0
        %518 = vmatpush1.xpose.msra.mxu0 0.0
        %519 = vmatprep.subr.mxu0 0.0
        %520 = vmatpush1.xpose.msra.mxu0 0.0
        %521 = vmatprep.subr.mxu0 0.0
        %522 = vmatpush1.xpose.msra.mxu0 0.0
        %523 = vmatprep.subr.mxu0 0.0
        %524 = vmatpush1.xpose.msra.mxu0 0.0
        %525 = vmatprep.subr.mxu0 0.0
        %526 = vmatpush1.xpose.msra.mxu0 0.0
        %527 = vmatprep.subr.mxu0 0.0
        %528 = vmatpush1.xpose.msra.mxu0 0.0
        %529 = vmatprep.subr.mxu0 0.0
        %530 = vmatpush1.xpose.msra.mxu0 0.0
        %531 = vmatprep.subr.mxu0 0.0
        %532 = vmatpush1.xpose.msra.mxu0 0.0
        %533 = vmatprep.subr.mxu0 0.0
        %534 = vmatpush1.xpose.msra.mxu0 0.0
        %535 = vmatprep.subr.mxu0 0.0
        %536 = vmatpush1.xpose.msra.mxu0 0.0
        %537 = vmatprep.subr.mxu0 0.0
        %538 = vmatpush1.xpose.msra.mxu0 0.0
        %539 = vmatprep.subr.mxu0 0.0
        %540 = vmatpush1.xpose.msra.mxu0 0.0
        %541 = vmatprep.subr.mxu0 0.0
        %542 = vmatpush1.xpose.msra.mxu0 0.0
        %543 = vmatprep.subr.mxu0 0.0
        %544 = vmatpush1.xpose.msra.mxu0 0.0
        %545 = vmatprep.mubr.f32.mxu0 0.0
        %546 = vmatmul.mubr.f32.gmra.mrb[0].mxu0 %v476
        %v547 = vpop.f32.mrb[0].mxu0
        %v548 = vadd.f32 0.0, %v547
        %v549 = vpop.f32.mrb[0].mxu0
        %550 = vdwg.mxu0
        %v551 = vld [vmem:[#allocation3] sm:$0xff]
        %vm552 = vcmask 64512
        %v553 = vsel %vm552, %v548, -inf
        %554 = vmax.xlane.f32.xlu0 %v553
        %v555 = vpop.xlane.xlu0 %554
        %v556 = vmax.f32 %v551, %v555
        %v557 = vsub.f32 %v551, %v556
        %v558 = vpow.pop %v557
        %560 = vset.pattern.permute.xlu0 0
        %561 = vperm.xlu0 %560, %v556
        %v562 = vpop.permute.xlu0 %561
        %v564 = vsub.f32 %v548, %v562
        %v565 = vpow.pop %v564
        %v566 = vld [vmem:[#allocation4] sm:$0xff]
        %v567 = vmul.f32 %v558, %v566
        %v568 = vsel %vm552, %v565, 0.0
        %569 = vadd.xlane.f32.xlu0 %v568
        %v570 = vpop.xlane.xlu0 %569
        %v571 = vadd.f32 %v567, %v570
        %vm572 = vcmask 7168
        %573 = vst.msk [vmem:[#allocation4] sm:$0xff] %vm572, %v571
        %v574 = vld [vmem:[#allocation5] sm:$0xff]
        %576 = vset.pattern.permute.xlu0 0
        %577 = vperm.xlu0 %576, %v558
        %v578 = vpop.permute.xlu0 %577
        %v580 = vmul.f32 %v578, %v574
        %v582 = vsel %vm552, %v565, 0
        %584 = vmatprep.subr.mxu0 0.0
        %585 = vmatpush1.msra.mxu0 %v395
        %586 = vmatprep.subr.mxu0 0.0
        %587 = vmatpush1.msra.mxu0 0.0
        %588 = vmatprep.subr.mxu0 0.0
        %589 = vmatpush1.msra.mxu0 0.0
        %590 = vmatprep.subr.mxu0 0.0
        %591 = vmatpush1.msra.mxu0 0.0
        %592 = vmatprep.subr.mxu0 0.0
        %593 = vmatpush1.msra.mxu0 0.0
        %594 = vmatprep.subr.mxu0 0.0
        %595 = vmatpush1.msra.mxu0 0.0
        %596 = vmatprep.subr.mxu0 0.0
        %597 = vmatpush1.msra.mxu0 0.0
        %598 = vmatprep.subr.mxu0 0.0
        %599 = vmatpush1.msra.mxu0 0.0
        %600 = vmatprep.subr.mxu0 0.0
        %601 = vmatpush1.msra.mxu0 0.0
        %602 = vmatprep.subr.mxu0 0.0
        %603 = vmatpush1.msra.mxu0 0.0
        %604 = vmatprep.subr.mxu0 0.0
        %605 = vmatpush1.msra.mxu0 0.0
        %606 = vmatprep.subr.mxu0 0.0
        %607 = vmatpush1.msra.mxu0 0.0
        %608 = vmatprep.subr.mxu0 0.0
        %609 = vmatpush1.msra.mxu0 0.0
        %610 = vmatprep.subr.mxu0 0.0
        %611 = vmatpush1.msra.mxu0 0.0
        %612 = vmatprep.subr.mxu0 0.0
        %613 = vmatpush1.msra.mxu0 0.0
        %614 = vmatprep.subr.mxu0 0.0
        %615 = vmatpush1.msra.mxu0 0.0
        %616 = vmatprep.subr.mxu0 0.0
        %617 = vmatpush1.msra.mxu0 0.0
        %618 = vmatprep.subr.mxu0 0.0
        %619 = vmatpush1.msra.mxu0 0.0
        %620 = vmatprep.subr.mxu0 0.0
        %621 = vmatpush1.msra.mxu0 0.0
        %622 = vmatprep.subr.mxu0 0.0
        %623 = vmatpush1.msra.mxu0 0.0
        %624 = vmatprep.subr.mxu0 0.0
        %625 = vmatpush1.msra.mxu0 0.0
        %626 = vmatprep.subr.mxu0 0.0
        %627 = vmatpush1.msra.mxu0 0.0
        %628 = vmatprep.subr.mxu0 0.0
        %629 = vmatpush1.msra.mxu0 0.0
        %630 = vmatprep.subr.mxu0 0.0
        %631 = vmatpush1.msra.mxu0 0.0
        %632 = vmatprep.subr.mxu0 0.0
        %633 = vmatpush1.msra.mxu0 0.0
        %634 = vmatprep.subr.mxu0 0.0
        %635 = vmatpush1.msra.mxu0 0.0
        %636 = vmatprep.subr.mxu0 0.0
        %637 = vmatpush1.msra.mxu0 0.0
        %638 = vmatprep.subr.mxu0 0.0
        %639 = vmatpush1.msra.mxu0 0.0
        %640 = vmatprep.subr.mxu0 0.0
        %641 = vmatpush1.msra.mxu0 0.0
        %642 = vmatprep.subr.mxu0 0.0
        %643 = vmatpush1.msra.mxu0 0.0
        %644 = vmatprep.subr.mxu0 0.0
        %645 = vmatpush1.msra.mxu0 0.0
        %646 = vmatprep.subr.mxu0 0.0
        %647 = vmatpush1.msra.mxu0 0.0
        %648 = vmatprep.mubr.f32.mxu0 0.0
        %649 = vmatmul.mubr.f32.gmra.mrb[0].mxu0 %v582
        %v650 = vpop.f32.mrb[0].mxu0
        %v651 = vadd.f32 0.0, %v650
        %v652 = vpop.f32.mrb[0].mxu0
        %653 = vdwg.mxu0
        %v654 = vadd.f32 %v580, %v651
        %655 = vst.msk [vmem:[#allocation5] sm:$0xff] %vm400, %v654
        %656 = vst.msk [vmem:[#allocation3] sm:$0xff] %vm572, %v556
        // Predicated region
        $region57: #{tpu_custom_call.1} parent=35 // pred_check
          %p657 = pneg %p306
        $region58: #{tpu_custom_call.1} parent=35 // pred_check_branch
          %659 = sbr.rel (%p657) target = $region60
        $region59: #{tpu_custom_call.1} parent=35 // pred_region
          %v660 = vld [vmem:[#allocation4] sm:$0xff]
          %v661 = vrcp.pop %v660
          %v662 = vmul.f32 1.0, %v661
          %v663 = vld [vmem:[#allocation5] sm:$0xff]
          %665 = vset.pattern.permute.xlu0 0
          %666 = vperm.xlu0 %665, %v662
          %v667 = vpop.permute.xlu0 %666
          %v669 = vmul.f32 %v663, %v667
          %670 = vst.msk [vmem:[%s305] sm:$0xff] %vm400, %v669
        $region60: #{tpu_custom_call.1} parent=35 // pred_fallthru
          _
        %s671 = sand.u32 %s152, 1
        %s672 = scalar_lea.sflag [#allocation8], %s671
        %s673 = sand.u32 %s152, 1
        %s674 = smul.addr %s673, 8
        %s675 = scalar_lea.vmem [#allocation14], %s674
        // Predicated region
        $region61: #{tpu_custom_call.1} parent=35 // pred_check
          %p676 = pneg %p162
        $region62: #{tpu_custom_call.1} parent=35 // pred_check_branch
          %678 = sbr.rel (%p676) target = $region64
        $region63: #{tpu_custom_call.1} parent=35 // pred_region
          %s680 = ssub.s32 128, 128
          %681 = vsyncadd %s672, %s680
          %s682 = sadd.s32 %s31, %s30
          %s683 = smul.addr %s682, 128
          %s684 = scalar_lea.hbm %s4, %s683
          %s686 = sshll.u32 %s675, 4
          %s687 = int_to_ptr.vmem [resolvable:$true] %s686
          %689 = dma.vmem_to_hbm [thread:$0]  %s687, 128, %s684, %s672
        $region64: #{tpu_custom_call.1} parent=35 // pred_fallthru
          _
      $region36: #{tpu_custom_call.1} parent=5 // pred_fallthru
        _
      %p690 = scmp.le.s32.totalorder 2, %s20
      // Predicated region
      $region65: #{tpu_custom_call.1} parent=5 // pred_check
        %p691 = pneg %p690
      $region66: #{tpu_custom_call.1} parent=5 // pred_check_branch
        %693 = sbr.rel (%p691) target = $region68
      $region67: #{tpu_custom_call.1} parent=5 // pred_region
        %s694 = ssub.s32 %s20, 2
        // Predicated region
        $region69: #{tpu_custom_call.1} parent=67 // pred_check
          %p695 = pneg %p168
        $region70: #{tpu_custom_call.1} parent=67 // pred_check_branch
          %697 = sbr.rel (%p695) target = $region72
        $region71: #{tpu_custom_call.1} parent=67 // pred_region
          %s698 = sand.u32 %s153, 1
          %s699 = scalar_lea.sflag [#allocation8], %s698
          %s700 = sand.u32 %s153, 1
          %s701 = smul.addr %s700, 8
          %s702 = scalar_lea.vmem [#allocation14], %s701
          %703 = dma.done %s699, 128
        $region72: #{tpu_custom_call.1} parent=67 // pred_fallthru
          _
      $region68: #{tpu_custom_call.1} parent=5 // pred_fallthru
        _
    $region6: #{tpu_custom_call.1} parent=1 // loop_footer
      %s24 = sadd.s32 1, %s20
    $region7: #{tpu_custom_call.1} parent=1 // loop_footer_branch
      %19 = sbr.rel target = $region3
    $region8: #{tpu_custom_call.1} parent=1 // loop_exit
      _
    %704 = vsyncpa [#allocation7], 1
    %s705 = scalar_lea.sflag [#allocation7], 1
    %706 = vsyncpa %s705, 1
    %707 = vsyncpa [#allocation10], 1
    %s708 = scalar_lea.sflag [#allocation10], 1
    %709 = vsyncpa %s708, 1
    %710 = vsyncpa [#allocation13], 1
    %711 = vsyncpa [#allocation8], 1
    %s712 = scalar_lea.sflag [#allocation8], 1
    %713 = vsyncpa %s712, 1

</llo_original>
